<compile_context>
chip_gen: v7x
topology: tpu7x:2x2x1
jax: 0.10.0
libtpu: 0.0.40
codegen_flags: <defaults>
</compile_context>

<pallas_src>
import functools

import jax
import jax.numpy as jnp
from jax import lax
from jax.experimental import pallas as pl
from jax.experimental.pallas import tpu as pltpu

# OGB get_bond_feature_dims() vocabulary sizes (bond type, stereo, is_conjugated)
BOND_FEATURE_DIMS = (5, 6, 2)

_TARGET_TE = 512  # target edge-tile (rows per grid step); 512 x 128 f32 block = 256 KiB


def _round_up(x, m):
    return (x + m - 1) // m * m


def _choose_te(E):
    # Biggest sublane-aligned tile up to the target; small E -> one step, no padding blowup.
    return min(_TARGET_TE, _round_up(max(E, 1), 8))


def _pad_rows(x, e_pad):
    E = x.shape[0]
    if E == e_pad:
        return x
    pad = [(0, e_pad - E)] + [(0, 0)] * (x.ndim - 1)
    return jnp.pad(x, pad)


# --------------------------------------------------------------------------
# Kernels
# --------------------------------------------------------------------------
def _relu_kernel(x_ref, o_ref):
    o_ref[...] = jnp.maximum(x_ref[...], 0.0).astype(o_ref.dtype)


def _embed_relu_kernel(*refs, vocab_total, num_feats, use_message):
    """out = relu([msg +] sum_f Embedding_f(attrs[:, f]))

    Per-feature embedding tables are concatenated into one [vocab_total, dim] table;
    attrs arrive already offset into that concatenated vocabulary.  The gather is an
    MXU matmul: one-hot(attrs, summed over features) @ table.
    """
    if use_message:
        attrs_ref, table_ref, msg_ref, o_ref = refs
    else:
        attrs_ref, table_ref, o_ref = refs
        msg_ref = None
    te = o_ref.shape[0]
    iota = lax.broadcasted_iota(jnp.int32, (te, vocab_total), 1)      # built once
    onehot = (attrs_ref[:, 0:1] == iota).astype(jnp.float32)          # (te, V)
    for f in range(1, num_feats):                                     # static, tiny (3)
        onehot = onehot + (attrs_ref[:, f:f + 1] == iota).astype(jnp.float32)
    emb = jnp.dot(onehot, table_ref[...], preferred_element_type=jnp.float32)
    if use_message:
        emb = emb + msg_ref[...].astype(jnp.float32)
    o_ref[...] = jnp.maximum(emb, 0.0).astype(o_ref.dtype)


def _mlp_kernel(*refs, fuse_message_relu):
    """Linear(in,dim) -> ReLU -> Linear(dim,dim) [, then relu(msg + .)]."""
    if fuse_message_relu:
        x_ref, w1_ref, b1_ref, w2_ref, b2_ref, msg_ref, o_ref = refs
    else:
        x_ref, w1_ref, b1_ref, w2_ref, b2_ref, o_ref = refs
        msg_ref = None
    h = jnp.dot(x_ref[...], w1_ref[...], preferred_element_type=jnp.float32) + b1_ref[...]
    h = jnp.maximum(h, 0.0)
    y = jnp.dot(h, w2_ref[...], preferred_element_type=jnp.float32) + b2_ref[...]
    if fuse_message_relu:
        y = jnp.maximum(y + msg_ref[...].astype(jnp.float32), 0.0)
    o_ref[...] = y.astype(o_ref.dtype)


# --------------------------------------------------------------------------
# pallas_call wrappers
# --------------------------------------------------------------------------
def _relu(message):
    E, D = message.shape
    te = _choose_te(E)
    e_pad = _round_up(E, te)
    out = pl.pallas_call(
        _relu_kernel,
        out_shape=jax.ShapeDtypeStruct((e_pad, D), message.dtype),
        grid_spec=pltpu.PrefetchScalarGridSpec(
            num_scalar_prefetch=0,
            grid=(e_pad // te,),
            in_specs=[pl.BlockSpec((te, D), lambda i: (i, 0))],
            out_specs=pl.BlockSpec((te, D), lambda i: (i, 0)),
        ),
        compiler_params=pltpu.CompilerParams(dimension_semantics=("parallel",)),
    )(_pad_rows(message, e_pad))
    return out[:E]


def _embed_relu(attrs_global, table, message, *, out_dtype):
    """message=None -> relu(embed(attrs)); no zero-message DMA."""
    E, F = attrs_global.shape
    V, D = table.shape
    te = _choose_te(E)
    e_pad = _round_up(E, te)
    use_message = message is not None
    kernel = functools.partial(
        _embed_relu_kernel, vocab_total=V, num_feats=F, use_message=use_message)

    in_specs = [
        pl.BlockSpec((te, F), lambda i: (i, 0)),
        pl.BlockSpec((V, D), lambda i: (0, 0)),    # constant index -> resident across grid
    ]
    args = [_pad_rows(attrs_global, e_pad), table]
    if use_message:
        in_specs.append(pl.BlockSpec((te, D), lambda i: (i, 0)))
        args.append(_pad_rows(message, e_pad))

    out = pl.pallas_call(
        kernel,
        out_shape=jax.ShapeDtypeStruct((e_pad, D), out_dtype),
        grid_spec=pltpu.PrefetchScalarGridSpec(
            num_scalar_prefetch=0,
            grid=(e_pad // te,),
            in_specs=in_specs,
            out_specs=pl.BlockSpec((te, D), lambda i: (i, 0)),
        ),
        compiler_params=pltpu.CompilerParams(dimension_semantics=("parallel",)),
    )(*args)
    return out[:E]


def _mlp(x, w1, b1, w2, b2, message, *, out_dtype):
    """message=None -> plain MLP output (no relu, no message DMA)."""
    E, Cin = x.shape
    D = w1.shape[1]
    te = _choose_te(E)
    e_pad = _round_up(E, te)
    use_message = message is not None
    kernel = functools.partial(_mlp_kernel, fuse_message_relu=use_message)

    in_specs = [
        pl.BlockSpec((te, Cin), lambda i: (i, 0)),
        pl.BlockSpec((Cin, D), lambda i: (0, 0)),  # resident weights
        pl.BlockSpec((1, D), lambda i: (0, 0)),
        pl.BlockSpec((D, D), lambda i: (0, 0)),
        pl.BlockSpec((1, D), lambda i: (0, 0)),
    ]
    args = [_pad_rows(x, e_pad), w1, b1, w2, b2]
    if use_message:
        in_specs.append(pl.BlockSpec((te, D), lambda i: (i, 0)))
        args.append(_pad_rows(message, e_pad))

    out = pl.pallas_call(
        kernel,
        out_shape=jax.ShapeDtypeStruct((e_pad, D), out_dtype),
        grid_spec=pltpu.PrefetchScalarGridSpec(
            num_scalar_prefetch=0,
            grid=(e_pad // te,),
            in_specs=in_specs,
            out_specs=pl.BlockSpec((te, D), lambda i: (i, 0)),
        ),
        compiler_params=pltpu.CompilerParams(dimension_semantics=("parallel",)),
    )(*args)
    return out[:E]


# --------------------------------------------------------------------------
# Bond module (parameters + forward)
# --------------------------------------------------------------------------
def init_bond_params(key, dim, linear_in_dim=4):
    k1, k2, k3, k4, k5 = jax.random.split(key, 5)
    vocab_total = sum(BOND_FEATURE_DIMS)
    # BondEncoder: per-feature embedding tables (xavier_uniform), concatenated.
    lim_e = (6.0 / (vocab_total + dim)) ** 0.5
    table = jax.random.uniform(k1, (vocab_total, dim), jnp.float32, -lim_e, lim_e)
    # MLP bond_encoder: Linear(linear_in_dim, dim) -> ReLU -> Linear(dim, dim)
    # (PyTorch nn.Linear default init: U(-1/sqrt(fan_in), 1/sqrt(fan_in)) for W and b)
    lim1 = (1.0 / linear_in_dim) ** 0.5
    lim2 = (1.0 / dim) ** 0.5
    w1 = jax.random.uniform(k2, (linear_in_dim, dim), jnp.float32, -lim1, lim1)
    b1 = jax.random.uniform(k3, (1, dim), jnp.float32, -lim1, lim1)
    w2 = jax.random.uniform(k4, (dim, dim), jnp.float32, -lim2, lim2)
    b2 = jax.random.uniform(k5, (1, dim), jnp.float32, -lim2, lim2)
    offsets = jnp.array(
        [sum(BOND_FEATURE_DIMS[:i]) for i in range(len(BOND_FEATURE_DIMS))], jnp.int32
    )
    return dict(table=table, offsets=offsets, w1=w1, b1=b1, w2=w2, b2=b2)


def bond_forward(params, message, attrs, *, linear=False,
                 dont_use_message=False, peptides_flag=False, SSWL=False):
    if attrs is None:
        return _relu(message)
    if linear:
        x = attrs.astype(jnp.float32)
        if SSWL and not peptides_flag:
            out_dtype = jnp.result_type(message.dtype, jnp.float32)
            return _mlp(x, params["w1"], params["b1"], params["w2"], params["b2"],
                        message, out_dtype=out_dtype)
        # peptides or plain linear: MLP(attrs) only (no message, no final relu)
        return _mlp(x, params["w1"], params["b1"], params["w2"], params["b2"],
                    None, out_dtype=jnp.float32)
    # look-up-table path: shift each categorical feature into the concatenated vocab
    attrs_global = attrs.astype(jnp.int32) + params["offsets"][None, :]
    if dont_use_message:
        # relu(embed(attrs)); the `[:, None] ... .mean(dim=1)` branch is a mean over a
        # singleton dim and therefore numerically identical.
        return _embed_relu(attrs_global, params["table"], None,
                           out_dtype=params["table"].dtype)
    out_dtype = jnp.result_type(message.dtype, params["table"].dtype)
    return _embed_relu(attrs_global, params["table"], message, out_dtype=out_dtype)


# --------------------------------------------------------------------------
# Demo / self-check
# --------------------------------------------------------------------------
if __name__ == "__main__":
    dim = 128           # lane-dense output (multiple of 128)
    E = 600             # non-multiple of the tile -> exercises row padding; 2 grid steps
    linear_in_dim = 4
    key = jax.random.PRNGKey(0)
    kp, km, ka, kl = jax.random.split(key, 4)

    params = init_bond_params(kp, dim, linear_in_dim)
    message = jax.random.normal(km, (E, dim), jnp.float32)
    # categorical bond attrs, one column per OGB bond feature
    attrs_cat = jnp.stack(
        [jax.random.randint(jax.random.fold_in(ka, f), (E,), 0, v)
         for f, v in enumerate(BOND_FEATURE_DIMS)], axis=1).astype(jnp.int32)
    # continuous attrs for the linear path
    attrs_lin = jax.random.normal(kl, (E, linear_in_dim), jnp.float32)

    # --- default path: relu(message + BondEncoder(attrs)) -------------------
    out_embed = jax.block_until_ready(bond_forward(params, message, attrs_cat))
    ref_emb = jnp.maximum(
        message + params["table"][attrs_cat + params["offsets"][None, :]].sum(axis=1), 0.0)
    assert jnp.allclose(out_embed, ref_emb, atol=1e-5), "embed path mismatch"

    # --- dont_use_message: relu(BondEncoder(attrs)) --------------------------
    out_nomsg = jax.block_until_ready(
        bond_forward(params, message, attrs_cat, dont_use_message=True))
    ref_nomsg = jnp.maximum(
        params["table"][attrs_cat + params["offsets"][None, :]].sum(axis=1), 0.0)
    assert jnp.allclose(out_nomsg, ref_nomsg, atol=1e-5), "dont_use_message path mismatch"

    # --- attrs is None: relu(message) ----------------------------------------
    out_relu = jax.block_until_ready(bond_forward(params, message, None))
    assert jnp.allclose(out_relu, jnp.maximum(message, 0.0), atol=1e-6), "relu path mismatch"

    # --- linear path: MLP(attrs) ---------------------------------------------
    out_mlp = jax.block_until_ready(bond_forward(params, message, attrs_lin, linear=True))
    h_ref = jnp.maximum(attrs_lin @ params["w1"] + params["b1"], 0.0)
    ref_mlp = h_ref @ params["w2"] + params["b2"]
    assert jnp.allclose(out_mlp, ref_mlp, atol=1e-5), "linear path mismatch"

    # --- linear + SSWL path: relu(message + MLP(attrs)) ----------------------
    out_sswl = jax.block_until_ready(
        bond_forward(params, message, attrs_lin, linear=True, SSWL=True))
    assert jnp.allclose(out_sswl, jnp.maximum(message + ref_mlp, 0.0), atol=1e-5), "SSWL mismatch"

    # --- linear + SSWL + peptides: MLP(attrs) only ----------------------------
    out_pep = jax.block_until_ready(
        bond_forward(params, message, attrs_lin, linear=True, SSWL=True, peptides_flag=True))
    assert jnp.allclose(out_pep, ref_mlp, atol=1e-5), "peptides path mismatch"

    print("KERNEL_OK")
</pallas_src>

<mosaic_0001>
module attributes {stable_mosaic.version = 11 : i64} {
  func.func @_embed_relu_kernel(%arg0: i32, %arg1: memref<512x3xi32, #tpu.memory_space<vmem>>, %arg2: memref<13x128xf32, #tpu.memory_space<vmem>>, %arg3: memref<512x128xf32, #tpu.memory_space<vmem>>, %arg4: memref<512x128xf32, #tpu.memory_space<vmem>>) attributes {dimension_semantics = [#tpu.dimension_semantics<parallel>], iteration_bounds = array<i64: 2>, scalar_prefetch = 0 : i64, scratch_operands = 0 : i64, tpu.core_type = #tpu.core_type<tc>, window_params = [{transform_indices = @transform_0, window_bounds = array<i64: 512, 3>}, {pipeline_mode = #tpu.pipeline_mode<synchronous>, transform_indices = @transform_1, window_bounds = array<i64: 13, 128>}, {transform_indices = @transform_2, window_bounds = array<i64: 512, 128>}, {transform_indices = @transform_3, window_bounds = array<i64: 512, 128>}]} {
    %0 = tpu.iota {dimensions = array<i32: 1>} : vector<512x13xi32>
    %c0 = arith.constant 0 : index
    %c0_0 = arith.constant 0 : index
    %1 = vector.load %arg1[%c0, %c0_0] : memref<512x3xi32, #tpu.memory_space<vmem>>, vector<512x1xi32>
    %2 = vector.broadcast %1 : vector<512x1xi32> to vector<512x13xi32>
    %3 = arith.cmpi eq, %2, %0 : vector<512x13xi32>
    %4 = arith.extui %3 : vector<512x13xi1> to vector<512x13xi32>
    %5 = arith.sitofp %4 : vector<512x13xi32> to vector<512x13xf32>
    %c0_1 = arith.constant 0 : index
    %c1 = arith.constant 1 : index
    %6 = vector.load %arg1[%c0_1, %c1] : memref<512x3xi32, #tpu.memory_space<vmem>>, vector<512x1xi32>
    %7 = vector.broadcast %6 : vector<512x1xi32> to vector<512x13xi32>
    %8 = arith.cmpi eq, %7, %0 : vector<512x13xi32>
    %9 = arith.extui %8 : vector<512x13xi1> to vector<512x13xi32>
    %10 = arith.sitofp %9 : vector<512x13xi32> to vector<512x13xf32>
    %11 = arith.addf %5, %10 : vector<512x13xf32>
    %c0_2 = arith.constant 0 : index
    %c2 = arith.constant 2 : index
    %12 = vector.load %arg1[%c0_2, %c2] : memref<512x3xi32, #tpu.memory_space<vmem>>, vector<512x1xi32>
    %13 = vector.broadcast %12 : vector<512x1xi32> to vector<512x13xi32>
    %14 = arith.cmpi eq, %13, %0 : vector<512x13xi32>
    %15 = arith.extui %14 : vector<512x13xi1> to vector<512x13xi32>
    %16 = arith.sitofp %15 : vector<512x13xi32> to vector<512x13xf32>
    %17 = arith.addf %11, %16 : vector<512x13xf32>
    %c0_3 = arith.constant 0 : index
    %c0_4 = arith.constant 0 : index
    %18 = vector.load %arg2[%c0_3, %c0_4] : memref<13x128xf32, #tpu.memory_space<vmem>>, vector<13x128xf32>
    %cst = arith.constant dense<0.000000e+00> : vector<512x128xf32>
    %19 = tpu.matmul %17, %18, %cst {dimension_numbers = #tpu.dot_dimension_numbers<[1], [0], [0], [1], [0, 0, 1, 1], [], []>} : vector<512x13xf32>, vector<13x128xf32>, vector<512x128xf32> -> vector<512x128xf32>
    %c0_5 = arith.constant 0 : index
    %c0_6 = arith.constant 0 : index
    %20 = vector.load %arg3[%c0_5, %c0_6] : memref<512x128xf32, #tpu.memory_space<vmem>>, vector<512x128xf32>
    %21 = arith.addf %19, %20 : vector<512x128xf32>
    %cst_7 = arith.constant 0.000000e+00 : f32
    %22 = vector.broadcast %cst_7 : f32 to vector<512x128xf32>
    %23 = arith.maximumf %21, %22 : vector<512x128xf32>
    %c0_8 = arith.constant 0 : index
    %c0_9 = arith.constant 0 : index
    %24 = vector.load %arg4[%c0_8, %c0_9] : memref<512x128xf32, #tpu.memory_space<vmem>>, vector<512x128xf32>
    tpu.vector_store %arg4[%c0_8, %c0_9], %23 {strides = array<i32>} : memref<512x128xf32, #tpu.memory_space<vmem>>, vector<512x128xf32>,
    return
  }
  func.func @transform_0(%arg0: i32) -> (i32, i32) {
    %c0_i32 = arith.constant 0 : i32
    %c0_i32_0 = arith.constant 0 : i32
    return %arg0, %c0_i32 : i32, i32
  }
  func.func @transform_1(%arg0: i32) -> (i32, i32) {
    %c0_i32 = arith.constant 0 : i32
    %c0_i32_0 = arith.constant 0 : i32
    %c0_i32_1 = arith.constant 0 : i32
    return %c0_i32, %c0_i32_0 : i32, i32
  }
  func.func @transform_2(%arg0: i32) -> (i32, i32) {
    %c0_i32 = arith.constant 0 : i32
    %c0_i32_0 = arith.constant 0 : i32
    return %arg0, %c0_i32 : i32, i32
  }
  func.func @transform_3(%arg0: i32) -> (i32, i32) {
    %c0_i32 = arith.constant 0 : i32
    %c0_i32_0 = arith.constant 0 : i32
    return %arg0, %c0_i32 : i32, i32
  }
}

</mosaic_0001>

<llo_original>
// kernel: tpu_custom_call.1
$region0: #{tpu_custom_call.1}
  #allocation0 [shape = 'u32[]', space=smem, size = 0x4, offset = 0x4, fixed_abs, tag = 'smem constant byte address 0x4 - core index']
  #allocation1 [shape = 'u32[144,128]{1,0:T(1,128)}', space=vmem, size = 0x12000, scoped, tag = 'internal scratch']
  %s0 = inlined_call_operand.vmem [shape: s32[1024,3], index: 0, kind: input, shape index: {}]
  %s1 = inlined_call_operand.vmem [shape: f32[13,128], index: 1, kind: input, shape index: {}]
  %s2 = inlined_call_operand.vmem [shape: f32[1024,128], index: 2, kind: input, shape index: {}]
  %s3 = inlined_call_operand.hbm [shape: f32[1024,128], index: 3, kind: output, shape index: {}]
  %s4 = sld [smem:[#allocation0]]
  $region45: #{tpu_custom_call.1} parent=0
    _
  %s6 = ssub.s32 1, %s4
  %s7 = scalar_select 0, %s6, %s4
  $region1: #{tpu_custom_call.1} parent=0
    #allocation2 [shape = 'u8[524288]{0}', space=vmem, size = 0x80000, scoped, tag = 'output window, operand 0']
    #allocation3 [shape = 's32[2]{0}', space=sflag, size = 0x8, scoped, tag = 'scoped memory for tpu_custom_call.1']
    %8 = vsyncpa [#allocation3], 0
    %s9 = scalar_lea.sflag [#allocation3], 1
    %10 = vsyncpa %s9, 0
    loop: start=0, step=1, limit=4
    $region2: #{tpu_custom_call.1} parent=1 // loop_pre_header
      _
    $region3: #{tpu_custom_call.1} parent=1 // loop_header
      %s12 = sphi 0, %s16
      %p13 = scmp.ge.s32.totalorder %s12, 4
      %s22 = sphi 0, %s24
      %s25 = sphi 0, %s22
      %s26 = sphi 0, %s25
      %s42 = sphi 0, %s26
      %s46 = sphi 0, %s46
      %s48 = sphi 0, %s46
      %s49 = sphi 0, %s48
      %s63 = sphi 0, %s49
      %s69 = sphi 0, %s71
      %s72 = sphi 0, %s69
      %s73 = sphi 0, %s72
      %s89 = sphi 0, %s73
      %s95 = sphi 0, %s97
      %s98 = sphi 0, %s95
      %s99 = sphi 0, %s98
      %s115 = sphi 0, %s99
    $region4: #{tpu_custom_call.1} parent=1 // loop_header_branch
      %15 = sbr.rel (%p13) target = $region8
    $region5: #{tpu_custom_call.1} parent=1 // loop_body
      %s17 = ssub.s32 %s12, 1
      %s18 = ssub.s32 %s12, 2
      %s19 = sadd.s32 %s12, 1
      %s20 = ssub.s32 %s12, %s19
      %p21 = scmp.eq.s32.totalorder %s20, 0
      %s23 = sadd.s32 %s22, 1
      %s24 = scalar_select %p21, %s22, %s23
      %p27 = pneg %p21
      %p28 = scmp.eq.s32.totalorder %s12, 1
      %p29 = por %p27, %p28
      %p30 = scmp.ne.s32.totalorder %s22, %s25
      %p31 = scmp.eq.s32.totalorder %s12, 0
      %p32 = por %p30, %p31
      %p33 = scmp.ne.s32.totalorder %s22, %s25
      %p34 = scmp.eq.s32.totalorder %s17, 1
      %p35 = por %p33, %p34
      %p36 = scmp.ne.s32.totalorder %s25, %s26
      %p37 = scmp.eq.s32.totalorder %s17, 0
      %p38 = por %p36, %p37
      %p39 = scmp.ne.s32.totalorder %s25, %s26
      %p40 = scmp.eq.s32.totalorder %s18, 1
      %p41 = por %p39, %p40
      %p43 = scmp.ne.s32.totalorder %s26, %s42
      %p44 = scmp.eq.s32.totalorder %s18, 0
      %p45 = por %p43, %p44
      %s47 = sadd.s32 %s46, 1
      %p50 = scmp.eq.s32.totalorder %s12, 1
      %p51 = scmp.ne.s32.totalorder %s46, %s48
      %p52 = scmp.eq.s32.totalorder %s12, 0
      %p53 = por %p51, %p52
      %p54 = scmp.ne.s32.totalorder %s46, %s48
      %p55 = scmp.eq.s32.totalorder %s17, 1
      %p56 = por %p54, %p55
      %p57 = scmp.ne.s32.totalorder %s48, %s49
      %p58 = scmp.eq.s32.totalorder %s17, 0
      %p59 = por %p57, %p58
      %p60 = scmp.ne.s32.totalorder %s48, %s49
      %p61 = scmp.eq.s32.totalorder %s18, 1
      %p62 = por %p60, %p61
      %p64 = scmp.ne.s32.totalorder %s49, %s63
      %p65 = scmp.eq.s32.totalorder %s18, 0
      %p66 = por %p64, %p65
      %s67 = ssub.s32 %s12, %s19
      %p68 = scmp.eq.s32.totalorder %s67, 0
      %s70 = sadd.s32 %s69, 1
      %s71 = scalar_select %p68, %s69, %s70
      %p74 = pneg %p68
      %p75 = scmp.eq.s32.totalorder %s12, 1
      %p76 = por %p74, %p75
      %p77 = scmp.ne.s32.totalorder %s69, %s72
      %p78 = scmp.eq.s32.totalorder %s12, 0
      %p79 = por %p77, %p78
      %p80 = scmp.ne.s32.totalorder %s69, %s72
      %p81 = scmp.eq.s32.totalorder %s17, 1
      %p82 = por %p80, %p81
      %p83 = scmp.ne.s32.totalorder %s72, %s73
      %p84 = scmp.eq.s32.totalorder %s17, 0
      %p85 = por %p83, %p84
      %p86 = scmp.ne.s32.totalorder %s72, %s73
      %p87 = scmp.eq.s32.totalorder %s18, 1
      %p88 = por %p86, %p87
      %p90 = scmp.ne.s32.totalorder %s73, %s89
      %p91 = scmp.eq.s32.totalorder %s18, 0
      %p92 = por %p90, %p91
      %s93 = ssub.s32 %s12, %s19
      %p94 = scmp.eq.s32.totalorder %s93, 0
      %s96 = sadd.s32 %s95, 1
      %s97 = scalar_select %p94, %s95, %s96
      %p100 = pneg %p94
      %p101 = scmp.eq.s32.totalorder %s12, 1
      %p102 = por %p100, %p101
      %p103 = scmp.ne.s32.totalorder %s95, %s98
      %p104 = scmp.eq.s32.totalorder %s12, 0
      %p105 = por %p103, %p104
      %p106 = scmp.ne.s32.totalorder %s95, %s98
      %p107 = scmp.eq.s32.totalorder %s17, 1
      %p108 = por %p106, %p107
      %p109 = scmp.ne.s32.totalorder %s98, %s99
      %p110 = scmp.eq.s32.totalorder %s17, 0
      %p111 = por %p109, %p110
      %p112 = scmp.ne.s32.totalorder %s98, %s99
      %p113 = scmp.eq.s32.totalorder %s18, 1
      %p114 = por %p112, %p113
      %p116 = scmp.ne.s32.totalorder %s99, %s115
      %p117 = scmp.eq.s32.totalorder %s18, 0
      %p118 = por %p116, %p117
      %p119 = scmp.le.s32.totalorder 1, %s12
      %p120 = scmp.lt.s32.totalorder %s12, 3
      %p121 = pnand %p119, %p120
      %p122 = pneg %p121
      // Predicated region
      $region9: #{tpu_custom_call.1} parent=5 // pred_check
        _
      $region10: #{tpu_custom_call.1} parent=5 // pred_check_branch
        %124 = sbr.rel (%p121) target = $region12
      $region11: #{tpu_custom_call.1} parent=5 // pred_region
        %s125 = ssub.s32 %s12, 1
        // Predicated region
        $region13: #{tpu_custom_call.1} parent=11 // pred_check
          %p126 = pneg %p59
        $region14: #{tpu_custom_call.1} parent=11 // pred_check_branch
          %128 = sbr.rel (%p126) target = $region16
        $region15: #{tpu_custom_call.1} parent=11 // pred_region
          _
        $region16: #{tpu_custom_call.1} parent=11 // pred_fallthru
          _
      $region12: #{tpu_custom_call.1} parent=5 // pred_fallthru
        _
      %p129 = scmp.lt.s32.totalorder %s12, 2
      // Predicated region
      $region17: #{tpu_custom_call.1} parent=5 // pred_check
        %p130 = pneg %p129
      $region18: #{tpu_custom_call.1} parent=5 // pred_check_branch
        %132 = sbr.rel (%p130) target = $region20
      $region19: #{tpu_custom_call.1} parent=5 // pred_region
        // Predicated region
        $region21: #{tpu_custom_call.1} parent=19 // pred_check
          %p133 = pneg %p32
        $region22: #{tpu_custom_call.1} parent=19 // pred_check_branch
          %135 = sbr.rel (%p133) target = $region24
        $region23: #{tpu_custom_call.1} parent=19 // pred_region
          %s136 = smul.u32 64, %s12
          %p137 = scmp.lt.s32.totalorder %s136, 127
          %s138 = scalar_select %p137, %s136, 127
          %s139 = smul.addr %s138, 8
          %s140 = scalar_lea.vmem %s0, %s139
          %s141 = smul.u32 64, %s12
        $region24: #{tpu_custom_call.1} parent=19 // pred_fallthru
          _
        // Predicated region
        $region25: #{tpu_custom_call.1} parent=19 // pred_check
          %p142 = pneg %p79
        $region26: #{tpu_custom_call.1} parent=19 // pred_check_branch
          %144 = sbr.rel (%p142) target = $region28
        $region27: #{tpu_custom_call.1} parent=19 // pred_region
          %s145 = smul.u32 64, %s12
          %p146 = scmp.lt.s32.totalorder %s145, 127
          %s147 = scalar_select %p146, %s145, 127
          %s148 = smul.addr %s147, 8
          %s149 = scalar_lea.vmem %s2, %s148
          %s150 = smul.u32 64, %s12
        $region28: #{tpu_custom_call.1} parent=19 // pred_fallthru
          _
      $region20: #{tpu_custom_call.1} parent=5 // pred_fallthru
        _
      %p151 = scmp.le.s32.totalorder 1, %s12
      %p152 = scmp.lt.s32.totalorder %s12, 3
      %p153 = pnand %p151, %p152
      %p154 = pneg %p153
      // Predicated region
      $region29: #{tpu_custom_call.1} parent=5 // pred_check
        _
      $region30: #{tpu_custom_call.1} parent=5 // pred_check_branch
        %156 = sbr.rel (%p153) target = $region32
      $region31: #{tpu_custom_call.1} parent=5 // pred_region
        %s157 = ssub.s32 %s12, 1
        %s158 = smul.u32 64, %s17
        %p159 = scmp.lt.s32.totalorder %s158, 127
        %s160 = scalar_select %p159, %s158, 127
        %s161 = smul.addr %s160, 8
        %s162 = scalar_lea.vmem %s0, %s161
        %p163 = pneg %p38
        %p164 = pneg %p35
        %p165 = pneg %p59
        %p166 = pneg %p56
        %s167 = smul.u32 64, %s17
        %p168 = scmp.lt.s32.totalorder %s167, 127
        %s169 = scalar_select %p168, %s167, 127
        %s170 = smul.addr %s169, 8
        %s171 = scalar_lea.vmem %s2, %s170
        %p172 = pneg %p85
        %p173 = pneg %p82
        %p174 = pneg %p111
        %p175 = pneg %p108
        %s176 = sand.u32 %s98, 1
        %s177 = scalar_lea.sflag [#allocation3], %s176
        %s178 = sand.u32 %s98, 1
        %s179 = smul.addr %s178, 512
        %s180 = scalar_lea.vmem [#allocation2], %s179
        %s181 = smul.u32 64, %s17
        %p182 = scmp.lt.s32.totalorder %s181, 127
        %s183 = scalar_select %p182, %s181, 127
        %s184 = smul.addr %s183, 8
        %s185 = scalar_lea.vmem %s0, %s184
        %s186 = smul.u32 64, %s17
        %s187 = smul.u32 64, %s17
        %p188 = scmp.lt.s32.totalorder %s187, 127
        %s189 = scalar_select %p188, %s187, 127
        %s190 = smul.addr %s189, 8
        %s191 = scalar_lea.vmem %s2, %s190
        %s192 = smul.u32 64, %s17
        %s193 = smul.u32 64, %s17
        %v194 = vlaneseq
        %v195 = vand.u32 %v194, 127
        %v196 = vld [vmem:[%s185] sm:$0xff]
        %v197 = vld [vmem:[%s185 + $0x8] sm:$0xff]
        %v198 = vld [vmem:[%s185 + $0x10] sm:$0xff]
        %v199 = vld [vmem:[%s185 + $0x18] sm:$0xff]
        %v200 = vld [vmem:[%s185 + $0x20] sm:$0xff]
        %v201 = vld [vmem:[%s185 + $0x28] sm:$0xff]
        %v202 = vld [vmem:[%s185 + $0x30] sm:$0xff]
        %v203 = vld [vmem:[%s185 + $0x38] sm:$0xff]
        %v204 = vld [vmem:[%s185 + $0x40] sm:$0xff]
        %v205 = vld [vmem:[%s185 + $0x48] sm:$0xff]
        %v206 = vld [vmem:[%s185 + $0x50] sm:$0xff]
        %v207 = vld [vmem:[%s185 + $0x58] sm:$0xff]
        %v208 = vld [vmem:[%s185 + $0x60] sm:$0xff]
        %v209 = vld [vmem:[%s185 + $0x68] sm:$0xff]
        %v210 = vld [vmem:[%s185 + $0x70] sm:$0xff]
        %v211 = vld [vmem:[%s185 + $0x78] sm:$0xff]
        %v212 = vld [vmem:[%s185 + $0x80] sm:$0xff]
        %v213 = vld [vmem:[%s185 + $0x88] sm:$0xff]
        %v214 = vld [vmem:[%s185 + $0x90] sm:$0xff]
        %v215 = vld [vmem:[%s185 + $0x98] sm:$0xff]
        %v216 = vld [vmem:[%s185 + $0xa0] sm:$0xff]
        %v217 = vld [vmem:[%s185 + $0xa8] sm:$0xff]
        %v218 = vld [vmem:[%s185 + $0xb0] sm:$0xff]
        %v219 = vld [vmem:[%s185 + $0xb8] sm:$0xff]
        %v220 = vld [vmem:[%s185 + $0xc0] sm:$0xff]
        %v221 = vld [vmem:[%s185 + $0xc8] sm:$0xff]
        %v222 = vld [vmem:[%s185 + $0xd0] sm:$0xff]
        %v223 = vld [vmem:[%s185 + $0xd8] sm:$0xff]
        %v224 = vld [vmem:[%s185 + $0xe0] sm:$0xff]
        %v225 = vld [vmem:[%s185 + $0xe8] sm:$0xff]
        %v226 = vld [vmem:[%s185 + $0xf0] sm:$0xff]
        %v227 = vld [vmem:[%s185 + $0xf8] sm:$0xff]
        %v228 = vld [vmem:[%s185 + $0x100] sm:$0xff]
        %v229 = vld [vmem:[%s185 + $0x108] sm:$0xff]
        %v230 = vld [vmem:[%s185 + $0x110] sm:$0xff]
        %v231 = vld [vmem:[%s185 + $0x118] sm:$0xff]
        %v232 = vld [vmem:[%s185 + $0x120] sm:$0xff]
        %v233 = vld [vmem:[%s185 + $0x128] sm:$0xff]
        %v234 = vld [vmem:[%s185 + $0x130] sm:$0xff]
        %v235 = vld [vmem:[%s185 + $0x138] sm:$0xff]
        %v236 = vld [vmem:[%s185 + $0x140] sm:$0xff]
        %v237 = vld [vmem:[%s185 + $0x148] sm:$0xff]
        %v238 = vld [vmem:[%s185 + $0x150] sm:$0xff]
        %v239 = vld [vmem:[%s185 + $0x158] sm:$0xff]
        %v240 = vld [vmem:[%s185 + $0x160] sm:$0xff]
        %v241 = vld [vmem:[%s185 + $0x168] sm:$0xff]
        %v242 = vld [vmem:[%s185 + $0x170] sm:$0xff]
        %v243 = vld [vmem:[%s185 + $0x178] sm:$0xff]
        %v244 = vld [vmem:[%s185 + $0x180] sm:$0xff]
        %v245 = vld [vmem:[%s185 + $0x188] sm:$0xff]
        %v246 = vld [vmem:[%s185 + $0x190] sm:$0xff]
        %v247 = vld [vmem:[%s185 + $0x198] sm:$0xff]
        %v248 = vld [vmem:[%s185 + $0x1a0] sm:$0xff]
        %v249 = vld [vmem:[%s185 + $0x1a8] sm:$0xff]
        %v250 = vld [vmem:[%s185 + $0x1b0] sm:$0xff]
        %v251 = vld [vmem:[%s185 + $0x1b8] sm:$0xff]
        %v252 = vld [vmem:[%s185 + $0x1c0] sm:$0xff]
        %v253 = vld [vmem:[%s185 + $0x1c8] sm:$0xff]
        %v254 = vld [vmem:[%s185 + $0x1d0] sm:$0xff]
        %v255 = vld [vmem:[%s185 + $0x1d8] sm:$0xff]
        %v256 = vld [vmem:[%s185 + $0x1e0] sm:$0xff]
        %v257 = vld [vmem:[%s185 + $0x1e8] sm:$0xff]
        %v258 = vld [vmem:[%s185 + $0x1f0] sm:$0xff]
        %v259 = vld [vmem:[%s185 + $0x1f8] sm:$0xff]
        %260 = vset.pattern.permute.xlu0 0
        %261 = vperm.xlu0 %260, %v196
        %v262 = vpop.permute.xlu0 %261
        %263 = vset.pattern.permute.xlu0 0
        %264 = vperm.xlu0 %263, %v197
        %v265 = vpop.permute.xlu0 %264
        %266 = vset.pattern.permute.xlu0 0
        %267 = vperm.xlu0 %266, %v198
        %v268 = vpop.permute.xlu0 %267
        %269 = vset.pattern.permute.xlu0 0
        %270 = vperm.xlu0 %269, %v199
        %v271 = vpop.permute.xlu0 %270
        %272 = vset.pattern.permute.xlu0 0
        %273 = vperm.xlu0 %272, %v200
        %v274 = vpop.permute.xlu0 %273
        %275 = vset.pattern.permute.xlu0 0
        %276 = vperm.xlu0 %275, %v201
        %v277 = vpop.permute.xlu0 %276
        %278 = vset.pattern.permute.xlu0 0
        %279 = vperm.xlu0 %278, %v202
        %v280 = vpop.permute.xlu0 %279
        %281 = vset.pattern.permute.xlu0 0
        %282 = vperm.xlu0 %281, %v203
        %v283 = vpop.permute.xlu0 %282
        %284 = vset.pattern.permute.xlu0 0
        %285 = vperm.xlu0 %284, %v204
        %v286 = vpop.permute.xlu0 %285
        %287 = vset.pattern.permute.xlu0 0
        %288 = vperm.xlu0 %287, %v205
        %v289 = vpop.permute.xlu0 %288
        %290 = vset.pattern.permute.xlu0 0
        %291 = vperm.xlu0 %290, %v206
        %v292 = vpop.permute.xlu0 %291
        %293 = vset.pattern.permute.xlu0 0
        %294 = vperm.xlu0 %293, %v207
        %v295 = vpop.permute.xlu0 %294
        %296 = vset.pattern.permute.xlu0 0
        %297 = vperm.xlu0 %296, %v208
        %v298 = vpop.permute.xlu0 %297
        %299 = vset.pattern.permute.xlu0 0
        %300 = vperm.xlu0 %299, %v209
        %v301 = vpop.permute.xlu0 %300
        %302 = vset.pattern.permute.xlu0 0
        %303 = vperm.xlu0 %302, %v210
        %v304 = vpop.permute.xlu0 %303
        %305 = vset.pattern.permute.xlu0 0
        %306 = vperm.xlu0 %305, %v211
        %v307 = vpop.permute.xlu0 %306
        %308 = vset.pattern.permute.xlu0 0
        %309 = vperm.xlu0 %308, %v212
        %v310 = vpop.permute.xlu0 %309
        %311 = vset.pattern.permute.xlu0 0
        %312 = vperm.xlu0 %311, %v213
        %v313 = vpop.permute.xlu0 %312
        %314 = vset.pattern.permute.xlu0 0
        %315 = vperm.xlu0 %314, %v214
        %v316 = vpop.permute.xlu0 %315
        %317 = vset.pattern.permute.xlu0 0
        %318 = vperm.xlu0 %317, %v215
        %v319 = vpop.permute.xlu0 %318
        %320 = vset.pattern.permute.xlu0 0
        %321 = vperm.xlu0 %320, %v216
        %v322 = vpop.permute.xlu0 %321
        %323 = vset.pattern.permute.xlu0 0
        %324 = vperm.xlu0 %323, %v217
        %v325 = vpop.permute.xlu0 %324
        %326 = vset.pattern.permute.xlu0 0
        %327 = vperm.xlu0 %326, %v218
        %v328 = vpop.permute.xlu0 %327
        %329 = vset.pattern.permute.xlu0 0
        %330 = vperm.xlu0 %329, %v219
        %v331 = vpop.permute.xlu0 %330
        %332 = vset.pattern.permute.xlu0 0
        %333 = vperm.xlu0 %332, %v220
        %v334 = vpop.permute.xlu0 %333
        %335 = vset.pattern.permute.xlu0 0
        %336 = vperm.xlu0 %335, %v221
        %v337 = vpop.permute.xlu0 %336
        %338 = vset.pattern.permute.xlu0 0
        %339 = vperm.xlu0 %338, %v222
        %v340 = vpop.permute.xlu0 %339
        %341 = vset.pattern.permute.xlu0 0
        %342 = vperm.xlu0 %341, %v223
        %v343 = vpop.permute.xlu0 %342
        %344 = vset.pattern.permute.xlu0 0
        %345 = vperm.xlu0 %344, %v224
        %v346 = vpop.permute.xlu0 %345
        %347 = vset.pattern.permute.xlu0 0
        %348 = vperm.xlu0 %347, %v225
        %v349 = vpop.permute.xlu0 %348
        %350 = vset.pattern.permute.xlu0 0
        %351 = vperm.xlu0 %350, %v226
        %v352 = vpop.permute.xlu0 %351
        %353 = vset.pattern.permute.xlu0 0
        %354 = vperm.xlu0 %353, %v227
        %v355 = vpop.permute.xlu0 %354
        %356 = vset.pattern.permute.xlu0 0
        %357 = vperm.xlu0 %356, %v228
        %v358 = vpop.permute.xlu0 %357
        %359 = vset.pattern.permute.xlu0 0
        %360 = vperm.xlu0 %359, %v229
        %v361 = vpop.permute.xlu0 %360
        %362 = vset.pattern.permute.xlu0 0
        %363 = vperm.xlu0 %362, %v230
        %v364 = vpop.permute.xlu0 %363
        %365 = vset.pattern.permute.xlu0 0
        %366 = vperm.xlu0 %365, %v231
        %v367 = vpop.permute.xlu0 %366
        %368 = vset.pattern.permute.xlu0 0
        %369 = vperm.xlu0 %368, %v232
        %v370 = vpop.permute.xlu0 %369
        %371 = vset.pattern.permute.xlu0 0
        %372 = vperm.xlu0 %371, %v233
        %v373 = vpop.permute.xlu0 %372
        %374 = vset.pattern.permute.xlu0 0
        %375 = vperm.xlu0 %374, %v234
        %v376 = vpop.permute.xlu0 %375
        %377 = vset.pattern.permute.xlu0 0
        %378 = vperm.xlu0 %377, %v235
        %v379 = vpop.permute.xlu0 %378
        %380 = vset.pattern.permute.xlu0 0
        %381 = vperm.xlu0 %380, %v236
        %v382 = vpop.permute.xlu0 %381
        %383 = vset.pattern.permute.xlu0 0
        %384 = vperm.xlu0 %383, %v237
        %v385 = vpop.permute.xlu0 %384
        %386 = vset.pattern.permute.xlu0 0
        %387 = vperm.xlu0 %386, %v238
        %v388 = vpop.permute.xlu0 %387
        %389 = vset.pattern.permute.xlu0 0
        %390 = vperm.xlu0 %389, %v239
        %v391 = vpop.permute.xlu0 %390
        %392 = vset.pattern.permute.xlu0 0
        %393 = vperm.xlu0 %392, %v240
        %v394 = vpop.permute.xlu0 %393
        %395 = vset.pattern.permute.xlu0 0
        %396 = vperm.xlu0 %395, %v241
        %v397 = vpop.permute.xlu0 %396
        %398 = vset.pattern.permute.xlu0 0
        %399 = vperm.xlu0 %398, %v242
        %v400 = vpop.permute.xlu0 %399
        %401 = vset.pattern.permute.xlu0 0
        %402 = vperm.xlu0 %401, %v243
        %v403 = vpop.permute.xlu0 %402
        %404 = vset.pattern.permute.xlu0 0
        %405 = vperm.xlu0 %404, %v244
        %v406 = vpop.permute.xlu0 %405
        %407 = vset.pattern.permute.xlu0 0
        %408 = vperm.xlu0 %407, %v245
        %v409 = vpop.permute.xlu0 %408
        %410 = vset.pattern.permute.xlu0 0
        %411 = vperm.xlu0 %410, %v246
        %v412 = vpop.permute.xlu0 %411
        %413 = vset.pattern.permute.xlu0 0
        %414 = vperm.xlu0 %413, %v247
        %v415 = vpop.permute.xlu0 %414
        %416 = vset.pattern.permute.xlu0 0
        %417 = vperm.xlu0 %416, %v248
        %v418 = vpop.permute.xlu0 %417
        %419 = vset.pattern.permute.xlu0 0
        %420 = vperm.xlu0 %419, %v249
        %v421 = vpop.permute.xlu0 %420
        %422 = vset.pattern.permute.xlu0 0
        %423 = vperm.xlu0 %422, %v250
        %v424 = vpop.permute.xlu0 %423
        %425 = vset.pattern.permute.xlu0 0
        %426 = vperm.xlu0 %425, %v251
        %v427 = vpop.permute.xlu0 %426
        %428 = vset.pattern.permute.xlu0 0
        %429 = vperm.xlu0 %428, %v252
        %v430 = vpop.permute.xlu0 %429
        %431 = vset.pattern.permute.xlu0 0
        %432 = vperm.xlu0 %431, %v253
        %v433 = vpop.permute.xlu0 %432
        %434 = vset.pattern.permute.xlu0 0
        %435 = vperm.xlu0 %434, %v254
        %v436 = vpop.permute.xlu0 %435
        %437 = vset.pattern.permute.xlu0 0
        %438 = vperm.xlu0 %437, %v255
        %v439 = vpop.permute.xlu0 %438
        %440 = vset.pattern.permute.xlu0 0
        %441 = vperm.xlu0 %440, %v256
        %v442 = vpop.permute.xlu0 %441
        %443 = vset.pattern.permute.xlu0 0
        %444 = vperm.xlu0 %443, %v257
        %v445 = vpop.permute.xlu0 %444
        %446 = vset.pattern.permute.xlu0 0
        %447 = vperm.xlu0 %446, %v258
        %v448 = vpop.permute.xlu0 %447
        %449 = vset.pattern.permute.xlu0 0
        %450 = vperm.xlu0 %449, %v259
        %v451 = vpop.permute.xlu0 %450
        %vm452 = vcmp.eq.s32.totalorder %v262, %v195
        %vm453 = vcmp.eq.s32.totalorder %v265, %v195
        %vm454 = vcmp.eq.s32.totalorder %v268, %v195
        %vm455 = vcmp.eq.s32.totalorder %v271, %v195
        %vm456 = vcmp.eq.s32.totalorder %v274, %v195
        %vm457 = vcmp.eq.s32.totalorder %v277, %v195
        %vm458 = vcmp.eq.s32.totalorder %v280, %v195
        %vm459 = vcmp.eq.s32.totalorder %v283, %v195
        %vm460 = vcmp.eq.s32.totalorder %v286, %v195
        %vm461 = vcmp.eq.s32.totalorder %v289, %v195
        %vm462 = vcmp.eq.s32.totalorder %v292, %v195
        %vm463 = vcmp.eq.s32.totalorder %v295, %v195
        %vm464 = vcmp.eq.s32.totalorder %v298, %v195
        %vm465 = vcmp.eq.s32.totalorder %v301, %v195
        %vm466 = vcmp.eq.s32.totalorder %v304, %v195
        %vm467 = vcmp.eq.s32.totalorder %v307, %v195
        %vm468 = vcmp.eq.s32.totalorder %v310, %v195
        %vm469 = vcmp.eq.s32.totalorder %v313, %v195
        %vm470 = vcmp.eq.s32.totalorder %v316, %v195
        %vm471 = vcmp.eq.s32.totalorder %v319, %v195
        %vm472 = vcmp.eq.s32.totalorder %v322, %v195
        %vm473 = vcmp.eq.s32.totalorder %v325, %v195
        %vm474 = vcmp.eq.s32.totalorder %v328, %v195
        %vm475 = vcmp.eq.s32.totalorder %v331, %v195
        %vm476 = vcmp.eq.s32.totalorder %v334, %v195
        %vm477 = vcmp.eq.s32.totalorder %v337, %v195
        %vm478 = vcmp.eq.s32.totalorder %v340, %v195
        %vm479 = vcmp.eq.s32.totalorder %v343, %v195
        %vm480 = vcmp.eq.s32.totalorder %v346, %v195
        %vm481 = vcmp.eq.s32.totalorder %v349, %v195
        %vm482 = vcmp.eq.s32.totalorder %v352, %v195
        %vm483 = vcmp.eq.s32.totalorder %v355, %v195
        %vm484 = vcmp.eq.s32.totalorder %v358, %v195
        %vm485 = vcmp.eq.s32.totalorder %v361, %v195
        %vm486 = vcmp.eq.s32.totalorder %v364, %v195
        %vm487 = vcmp.eq.s32.totalorder %v367, %v195
        %vm488 = vcmp.eq.s32.totalorder %v370, %v195
        %vm489 = vcmp.eq.s32.totalorder %v373, %v195
        %vm490 = vcmp.eq.s32.totalorder %v376, %v195
        %vm491 = vcmp.eq.s32.totalorder %v379, %v195
        %vm492 = vcmp.eq.s32.totalorder %v382, %v195
        %vm493 = vcmp.eq.s32.totalorder %v385, %v195
        %vm494 = vcmp.eq.s32.totalorder %v388, %v195
        %vm495 = vcmp.eq.s32.totalorder %v391, %v195
        %vm496 = vcmp.eq.s32.totalorder %v394, %v195
        %vm497 = vcmp.eq.s32.totalorder %v397, %v195
        %vm498 = vcmp.eq.s32.totalorder %v400, %v195
        %vm499 = vcmp.eq.s32.totalorder %v403, %v195
        %vm500 = vcmp.eq.s32.totalorder %v406, %v195
        %vm501 = vcmp.eq.s32.totalorder %v409, %v195
        %vm502 = vcmp.eq.s32.totalorder %v412, %v195
        %vm503 = vcmp.eq.s32.totalorder %v415, %v195
        %vm504 = vcmp.eq.s32.totalorder %v418, %v195
        %vm505 = vcmp.eq.s32.totalorder %v421, %v195
        %vm506 = vcmp.eq.s32.totalorder %v424, %v195
        %vm507 = vcmp.eq.s32.totalorder %v427, %v195
        %vm508 = vcmp.eq.s32.totalorder %v430, %v195
        %vm509 = vcmp.eq.s32.totalorder %v433, %v195
        %vm510 = vcmp.eq.s32.totalorder %v436, %v195
        %vm511 = vcmp.eq.s32.totalorder %v439, %v195
        %vm512 = vcmp.eq.s32.totalorder %v442, %v195
        %vm513 = vcmp.eq.s32.totalorder %v445, %v195
        %vm514 = vcmp.eq.s32.totalorder %v448, %v195
        %vm515 = vcmp.eq.s32.totalorder %v451, %v195
        %v516 = vsel %vm452, 1, 0
        %v517 = vsel %vm453, 1, 0
        %v518 = vsel %vm454, 1, 0
        %v519 = vsel %vm455, 1, 0
        %v520 = vsel %vm456, 1, 0
        %v521 = vsel %vm457, 1, 0
        %v522 = vsel %vm458, 1, 0
        %v523 = vsel %vm459, 1, 0
        %v524 = vsel %vm460, 1, 0
        %v525 = vsel %vm461, 1, 0
        %v526 = vsel %vm462, 1, 0
        %v527 = vsel %vm463, 1, 0
        %v528 = vsel %vm464, 1, 0
        %v529 = vsel %vm465, 1, 0
        %v530 = vsel %vm466, 1, 0
        %v531 = vsel %vm467, 1, 0
        %v532 = vsel %vm468, 1, 0
        %v533 = vsel %vm469, 1, 0
        %v534 = vsel %vm470, 1, 0
        %v535 = vsel %vm471, 1, 0
        %v536 = vsel %vm472, 1, 0
        %v537 = vsel %vm473, 1, 0
        %v538 = vsel %vm474, 1, 0
        %v539 = vsel %vm475, 1, 0
        %v540 = vsel %vm476, 1, 0
        %v541 = vsel %vm477, 1, 0
        %v542 = vsel %vm478, 1, 0
        %v543 = vsel %vm479, 1, 0
        %v544 = vsel %vm480, 1, 0
        %v545 = vsel %vm481, 1, 0
        %v546 = vsel %vm482, 1, 0
        %v547 = vsel %vm483, 1, 0
        %v548 = vsel %vm484, 1, 0
        %v549 = vsel %vm485, 1, 0
        %v550 = vsel %vm486, 1, 0
        %v551 = vsel %vm487, 1, 0
        %v552 = vsel %vm488, 1, 0
        %v553 = vsel %vm489, 1, 0
        %v554 = vsel %vm490, 1, 0
        %v555 = vsel %vm491, 1, 0
        %v556 = vsel %vm492, 1, 0
        %v557 = vsel %vm493, 1, 0
        %v558 = vsel %vm494, 1, 0
        %v559 = vsel %vm495, 1, 0
        %v560 = vsel %vm496, 1, 0
        %v561 = vsel %vm497, 1, 0
        %v562 = vsel %vm498, 1, 0
        %v563 = vsel %vm499, 1, 0
        %v564 = vsel %vm500, 1, 0
        %v565 = vsel %vm501, 1, 0
        %v566 = vsel %vm502, 1, 0
        %v567 = vsel %vm503, 1, 0
        %v568 = vsel %vm504, 1, 0
        %v569 = vsel %vm505, 1, 0
        %v570 = vsel %vm506, 1, 0
        %v571 = vsel %vm507, 1, 0
        %v572 = vsel %vm508, 1, 0
        %v573 = vsel %vm509, 1, 0
        %v574 = vsel %vm510, 1, 0
        %v575 = vsel %vm511, 1, 0
        %v576 = vsel %vm512, 1, 0
        %v577 = vsel %vm513, 1, 0
        %v578 = vsel %vm514, 1, 0
        %v579 = vsel %vm515, 1, 0
        %v580 = vcvt.s32.f32 %v516
        %v581 = vcvt.s32.f32 %v517
        %v582 = vcvt.s32.f32 %v518
        %v583 = vcvt.s32.f32 %v519
        %v584 = vcvt.s32.f32 %v520
        %v585 = vcvt.s32.f32 %v521
        %v586 = vcvt.s32.f32 %v522
        %v587 = vcvt.s32.f32 %v523
        %v588 = vcvt.s32.f32 %v524
        %v589 = vcvt.s32.f32 %v525
        %v590 = vcvt.s32.f32 %v526
        %v591 = vcvt.s32.f32 %v527
        %v592 = vcvt.s32.f32 %v528
        %v593 = vcvt.s32.f32 %v529
        %v594 = vcvt.s32.f32 %v530
        %v595 = vcvt.s32.f32 %v531
        %v596 = vcvt.s32.f32 %v532
        %v597 = vcvt.s32.f32 %v533
        %v598 = vcvt.s32.f32 %v534
        %v599 = vcvt.s32.f32 %v535
        %v600 = vcvt.s32.f32 %v536
        %v601 = vcvt.s32.f32 %v537
        %v602 = vcvt.s32.f32 %v538
        %v603 = vcvt.s32.f32 %v539
        %v604 = vcvt.s32.f32 %v540
        %v605 = vcvt.s32.f32 %v541
        %v606 = vcvt.s32.f32 %v542
        %v607 = vcvt.s32.f32 %v543
        %v608 = vcvt.s32.f32 %v544
        %v609 = vcvt.s32.f32 %v545
        %v610 = vcvt.s32.f32 %v546
        %v611 = vcvt.s32.f32 %v547
        %v612 = vcvt.s32.f32 %v548
        %v613 = vcvt.s32.f32 %v549
        %v614 = vcvt.s32.f32 %v550
        %v615 = vcvt.s32.f32 %v551
        %v616 = vcvt.s32.f32 %v552
        %v617 = vcvt.s32.f32 %v553
        %v618 = vcvt.s32.f32 %v554
        %v619 = vcvt.s32.f32 %v555
        %v620 = vcvt.s32.f32 %v556
        %v621 = vcvt.s32.f32 %v557
        %v622 = vcvt.s32.f32 %v558
        %v623 = vcvt.s32.f32 %v559
        %v624 = vcvt.s32.f32 %v560
        %v625 = vcvt.s32.f32 %v561
        %v626 = vcvt.s32.f32 %v562
        %v627 = vcvt.s32.f32 %v563
        %v628 = vcvt.s32.f32 %v564
        %v629 = vcvt.s32.f32 %v565
        %v630 = vcvt.s32.f32 %v566
        %v631 = vcvt.s32.f32 %v567
        %v632 = vcvt.s32.f32 %v568
        %v633 = vcvt.s32.f32 %v569
        %v634 = vcvt.s32.f32 %v570
        %v635 = vcvt.s32.f32 %v571
        %v636 = vcvt.s32.f32 %v572
        %v637 = vcvt.s32.f32 %v573
        %v638 = vcvt.s32.f32 %v574
        %v639 = vcvt.s32.f32 %v575
        %v640 = vcvt.s32.f32 %v576
        %v641 = vcvt.s32.f32 %v577
        %v642 = vcvt.s32.f32 %v578
        %v643 = vcvt.s32.f32 %v579
        %644 = vset.pattern.permute.xlu0 1
        %645 = vperm.xlu0 %644, %v196
        %v646 = vpop.permute.xlu0 %645
        %647 = vset.pattern.permute.xlu0 1
        %648 = vperm.xlu0 %647, %v197
        %v649 = vpop.permute.xlu0 %648
        %650 = vset.pattern.permute.xlu0 1
        %651 = vperm.xlu0 %650, %v198
        %v652 = vpop.permute.xlu0 %651
        %653 = vset.pattern.permute.xlu0 1
        %654 = vperm.xlu0 %653, %v199
        %v655 = vpop.permute.xlu0 %654
        %656 = vset.pattern.permute.xlu0 1
        %657 = vperm.xlu0 %656, %v200
        %v658 = vpop.permute.xlu0 %657
        %659 = vset.pattern.permute.xlu0 1
        %660 = vperm.xlu0 %659, %v201
        %v661 = vpop.permute.xlu0 %660
        %662 = vset.pattern.permute.xlu0 1
        %663 = vperm.xlu0 %662, %v202
        %v664 = vpop.permute.xlu0 %663
        %665 = vset.pattern.permute.xlu0 1
        %666 = vperm.xlu0 %665, %v203
        %v667 = vpop.permute.xlu0 %666
        %668 = vset.pattern.permute.xlu0 1
        %669 = vperm.xlu0 %668, %v204
        %v670 = vpop.permute.xlu0 %669
        %671 = vset.pattern.permute.xlu0 1
        %672 = vperm.xlu0 %671, %v205
        %v673 = vpop.permute.xlu0 %672
        %674 = vset.pattern.permute.xlu0 1
        %675 = vperm.xlu0 %674, %v206
        %v676 = vpop.permute.xlu0 %675
        %677 = vset.pattern.permute.xlu0 1
        %678 = vperm.xlu0 %677, %v207
        %v679 = vpop.permute.xlu0 %678
        %680 = vset.pattern.permute.xlu0 1
        %681 = vperm.xlu0 %680, %v208
        %v682 = vpop.permute.xlu0 %681
        %683 = vset.pattern.permute.xlu0 1
        %684 = vperm.xlu0 %683, %v209
        %v685 = vpop.permute.xlu0 %684
        %686 = vset.pattern.permute.xlu0 1
        %687 = vperm.xlu0 %686, %v210
        %v688 = vpop.permute.xlu0 %687
        %689 = vset.pattern.permute.xlu0 1
        %690 = vperm.xlu0 %689, %v211
        %v691 = vpop.permute.xlu0 %690
        %692 = vset.pattern.permute.xlu0 1
        %693 = vperm.xlu0 %692, %v212
        %v694 = vpop.permute.xlu0 %693
        %695 = vset.pattern.permute.xlu0 1
        %696 = vperm.xlu0 %695, %v213
        %v697 = vpop.permute.xlu0 %696
        %698 = vset.pattern.permute.xlu0 1
        %699 = vperm.xlu0 %698, %v214
        %v700 = vpop.permute.xlu0 %699
        %701 = vset.pattern.permute.xlu0 1
        %702 = vperm.xlu0 %701, %v215
        %v703 = vpop.permute.xlu0 %702
        %704 = vset.pattern.permute.xlu0 1
        %705 = vperm.xlu0 %704, %v216
        %v706 = vpop.permute.xlu0 %705
        %707 = vset.pattern.permute.xlu0 1
        %708 = vperm.xlu0 %707, %v217
        %v709 = vpop.permute.xlu0 %708
        %710 = vset.pattern.permute.xlu0 1
        %711 = vperm.xlu0 %710, %v218
        %v712 = vpop.permute.xlu0 %711
        %713 = vset.pattern.permute.xlu0 1
        %714 = vperm.xlu0 %713, %v219
        %v715 = vpop.permute.xlu0 %714
        %716 = vset.pattern.permute.xlu0 1
        %717 = vperm.xlu0 %716, %v220
        %v718 = vpop.permute.xlu0 %717
        %719 = vset.pattern.permute.xlu0 1
        %720 = vperm.xlu0 %719, %v221
        %v721 = vpop.permute.xlu0 %720
        %722 = vset.pattern.permute.xlu0 1
        %723 = vperm.xlu0 %722, %v222
        %v724 = vpop.permute.xlu0 %723
        %725 = vset.pattern.permute.xlu0 1
        %726 = vperm.xlu0 %725, %v223
        %v727 = vpop.permute.xlu0 %726
        %728 = vset.pattern.permute.xlu0 1
        %729 = vperm.xlu0 %728, %v224
        %v730 = vpop.permute.xlu0 %729
        %731 = vset.pattern.permute.xlu0 1
        %732 = vperm.xlu0 %731, %v225
        %v733 = vpop.permute.xlu0 %732
        %734 = vset.pattern.permute.xlu0 1
        %735 = vperm.xlu0 %734, %v226
        %v736 = vpop.permute.xlu0 %735
        %737 = vset.pattern.permute.xlu0 1
        %738 = vperm.xlu0 %737, %v227
        %v739 = vpop.permute.xlu0 %738
        %740 = vset.pattern.permute.xlu0 1
        %741 = vperm.xlu0 %740, %v228
        %v742 = vpop.permute.xlu0 %741
        %743 = vset.pattern.permute.xlu0 1
        %744 = vperm.xlu0 %743, %v229
        %v745 = vpop.permute.xlu0 %744
        %746 = vset.pattern.permute.xlu0 1
        %747 = vperm.xlu0 %746, %v230
        %v748 = vpop.permute.xlu0 %747
        %749 = vset.pattern.permute.xlu0 1
        %750 = vperm.xlu0 %749, %v231
        %v751 = vpop.permute.xlu0 %750
        %752 = vset.pattern.permute.xlu0 1
        %753 = vperm.xlu0 %752, %v232
        %v754 = vpop.permute.xlu0 %753
        %755 = vset.pattern.permute.xlu0 1
        %756 = vperm.xlu0 %755, %v233
        %v757 = vpop.permute.xlu0 %756
        %758 = vset.pattern.permute.xlu0 1
        %759 = vperm.xlu0 %758, %v234
        %v760 = vpop.permute.xlu0 %759
        %761 = vset.pattern.permute.xlu0 1
        %762 = vperm.xlu0 %761, %v235
        %v763 = vpop.permute.xlu0 %762
        %764 = vset.pattern.permute.xlu0 1
        %765 = vperm.xlu0 %764, %v236
        %v766 = vpop.permute.xlu0 %765
        %767 = vset.pattern.permute.xlu0 1
        %768 = vperm.xlu0 %767, %v237
        %v769 = vpop.permute.xlu0 %768
        %770 = vset.pattern.permute.xlu0 1
        %771 = vperm.xlu0 %770, %v238
        %v772 = vpop.permute.xlu0 %771
        %773 = vset.pattern.permute.xlu0 1
        %774 = vperm.xlu0 %773, %v239
        %v775 = vpop.permute.xlu0 %774
        %776 = vset.pattern.permute.xlu0 1
        %777 = vperm.xlu0 %776, %v240
        %v778 = vpop.permute.xlu0 %777
        %779 = vset.pattern.permute.xlu0 1
        %780 = vperm.xlu0 %779, %v241
        %v781 = vpop.permute.xlu0 %780
        %782 = vset.pattern.permute.xlu0 1
        %783 = vperm.xlu0 %782, %v242
        %v784 = vpop.permute.xlu0 %783
        %785 = vset.pattern.permute.xlu0 1
        %786 = vperm.xlu0 %785, %v243
        %v787 = vpop.permute.xlu0 %786
        %788 = vset.pattern.permute.xlu0 1
        %789 = vperm.xlu0 %788, %v244
        %v790 = vpop.permute.xlu0 %789
        %791 = vset.pattern.permute.xlu0 1
        %792 = vperm.xlu0 %791, %v245
        %v793 = vpop.permute.xlu0 %792
        %794 = vset.pattern.permute.xlu0 1
        %795 = vperm.xlu0 %794, %v246
        %v796 = vpop.permute.xlu0 %795
        %797 = vset.pattern.permute.xlu0 1
        %798 = vperm.xlu0 %797, %v247
        %v799 = vpop.permute.xlu0 %798
        %800 = vset.pattern.permute.xlu0 1
        %801 = vperm.xlu0 %800, %v248
        %v802 = vpop.permute.xlu0 %801
        %803 = vset.pattern.permute.xlu0 1
        %804 = vperm.xlu0 %803, %v249
        %v805 = vpop.permute.xlu0 %804
        %806 = vset.pattern.permute.xlu0 1
        %807 = vperm.xlu0 %806, %v250
        %v808 = vpop.permute.xlu0 %807
        %809 = vset.pattern.permute.xlu0 1
        %810 = vperm.xlu0 %809, %v251
        %v811 = vpop.permute.xlu0 %810
        %812 = vset.pattern.permute.xlu0 1
        %813 = vperm.xlu0 %812, %v252
        %v814 = vpop.permute.xlu0 %813
        %815 = vset.pattern.permute.xlu0 1
        %816 = vperm.xlu0 %815, %v253
        %v817 = vpop.permute.xlu0 %816
        %818 = vset.pattern.permute.xlu0 1
        %819 = vperm.xlu0 %818, %v254
        %v820 = vpop.permute.xlu0 %819
        %821 = vset.pattern.permute.xlu0 1
        %822 = vperm.xlu0 %821, %v255
        %v823 = vpop.permute.xlu0 %822
        %824 = vset.pattern.permute.xlu0 1
        %825 = vperm.xlu0 %824, %v256
        %v826 = vpop.permute.xlu0 %825
        %827 = vset.pattern.permute.xlu0 1
        %828 = vperm.xlu0 %827, %v257
        %v829 = vpop.permute.xlu0 %828
        %830 = vset.pattern.permute.xlu0 1
        %831 = vperm.xlu0 %830, %v258
        %v832 = vpop.permute.xlu0 %831
        %833 = vset.pattern.permute.xlu0 1
        %834 = vperm.xlu0 %833, %v259
        %v835 = vpop.permute.xlu0 %834
        %vm836 = vcmp.eq.s32.totalorder %v646, %v195
        %vm837 = vcmp.eq.s32.totalorder %v649, %v195
        %vm838 = vcmp.eq.s32.totalorder %v652, %v195
        %vm839 = vcmp.eq.s32.totalorder %v655, %v195
        %vm840 = vcmp.eq.s32.totalorder %v658, %v195
        %vm841 = vcmp.eq.s32.totalorder %v661, %v195
        %vm842 = vcmp.eq.s32.totalorder %v664, %v195
        %vm843 = vcmp.eq.s32.totalorder %v667, %v195
        %vm844 = vcmp.eq.s32.totalorder %v670, %v195
        %vm845 = vcmp.eq.s32.totalorder %v673, %v195
        %vm846 = vcmp.eq.s32.totalorder %v676, %v195
        %vm847 = vcmp.eq.s32.totalorder %v679, %v195
        %vm848 = vcmp.eq.s32.totalorder %v682, %v195
        %vm849 = vcmp.eq.s32.totalorder %v685, %v195
        %vm850 = vcmp.eq.s32.totalorder %v688, %v195
        %vm851 = vcmp.eq.s32.totalorder %v691, %v195
        %vm852 = vcmp.eq.s32.totalorder %v694, %v195
        %vm853 = vcmp.eq.s32.totalorder %v697, %v195
        %vm854 = vcmp.eq.s32.totalorder %v700, %v195
        %vm855 = vcmp.eq.s32.totalorder %v703, %v195
        %vm856 = vcmp.eq.s32.totalorder %v706, %v195
        %vm857 = vcmp.eq.s32.totalorder %v709, %v195
        %vm858 = vcmp.eq.s32.totalorder %v712, %v195
        %vm859 = vcmp.eq.s32.totalorder %v715, %v195
        %vm860 = vcmp.eq.s32.totalorder %v718, %v195
        %vm861 = vcmp.eq.s32.totalorder %v721, %v195
        %vm862 = vcmp.eq.s32.totalorder %v724, %v195
        %vm863 = vcmp.eq.s32.totalorder %v727, %v195
        %vm864 = vcmp.eq.s32.totalorder %v730, %v195
        %vm865 = vcmp.eq.s32.totalorder %v733, %v195
        %vm866 = vcmp.eq.s32.totalorder %v736, %v195
        %vm867 = vcmp.eq.s32.totalorder %v739, %v195
        %vm868 = vcmp.eq.s32.totalorder %v742, %v195
        %vm869 = vcmp.eq.s32.totalorder %v745, %v195
        %vm870 = vcmp.eq.s32.totalorder %v748, %v195
        %vm871 = vcmp.eq.s32.totalorder %v751, %v195
        %vm872 = vcmp.eq.s32.totalorder %v754, %v195
        %vm873 = vcmp.eq.s32.totalorder %v757, %v195
        %vm874 = vcmp.eq.s32.totalorder %v760, %v195
        %vm875 = vcmp.eq.s32.totalorder %v763, %v195
        %vm876 = vcmp.eq.s32.totalorder %v766, %v195
        %vm877 = vcmp.eq.s32.totalorder %v769, %v195
        %vm878 = vcmp.eq.s32.totalorder %v772, %v195
        %vm879 = vcmp.eq.s32.totalorder %v775, %v195
        %vm880 = vcmp.eq.s32.totalorder %v778, %v195
        %vm881 = vcmp.eq.s32.totalorder %v781, %v195
        %vm882 = vcmp.eq.s32.totalorder %v784, %v195
        %vm883 = vcmp.eq.s32.totalorder %v787, %v195
        %vm884 = vcmp.eq.s32.totalorder %v790, %v195
        %vm885 = vcmp.eq.s32.totalorder %v793, %v195
        %vm886 = vcmp.eq.s32.totalorder %v796, %v195
        %vm887 = vcmp.eq.s32.totalorder %v799, %v195
        %vm888 = vcmp.eq.s32.totalorder %v802, %v195
        %vm889 = vcmp.eq.s32.totalorder %v805, %v195
        %vm890 = vcmp.eq.s32.totalorder %v808, %v195
        %vm891 = vcmp.eq.s32.totalorder %v811, %v195
        %vm892 = vcmp.eq.s32.totalorder %v814, %v195
        %vm893 = vcmp.eq.s32.totalorder %v817, %v195
        %vm894 = vcmp.eq.s32.totalorder %v820, %v195
        %vm895 = vcmp.eq.s32.totalorder %v823, %v195
        %vm896 = vcmp.eq.s32.totalorder %v826, %v195
        %vm897 = vcmp.eq.s32.totalorder %v829, %v195
        %vm898 = vcmp.eq.s32.totalorder %v832, %v195
        %vm899 = vcmp.eq.s32.totalorder %v835, %v195
        %v900 = vsel %vm836, 1, 0
        %v901 = vsel %vm837, 1, 0
        %v902 = vsel %vm838, 1, 0
        %v903 = vsel %vm839, 1, 0
        %v904 = vsel %vm840, 1, 0
        %v905 = vsel %vm841, 1, 0
        %v906 = vsel %vm842, 1, 0
        %v907 = vsel %vm843, 1, 0
        %v908 = vsel %vm844, 1, 0
        %v909 = vsel %vm845, 1, 0
        %v910 = vsel %vm846, 1, 0
        %v911 = vsel %vm847, 1, 0
        %v912 = vsel %vm848, 1, 0
        %v913 = vsel %vm849, 1, 0
        %v914 = vsel %vm850, 1, 0
        %v915 = vsel %vm851, 1, 0
        %v916 = vsel %vm852, 1, 0
        %v917 = vsel %vm853, 1, 0
        %v918 = vsel %vm854, 1, 0
        %v919 = vsel %vm855, 1, 0
        %v920 = vsel %vm856, 1, 0
        %v921 = vsel %vm857, 1, 0
        %v922 = vsel %vm858, 1, 0
        %v923 = vsel %vm859, 1, 0
        %v924 = vsel %vm860, 1, 0
        %v925 = vsel %vm861, 1, 0
        %v926 = vsel %vm862, 1, 0
        %v927 = vsel %vm863, 1, 0
        %v928 = vsel %vm864, 1, 0
        %v929 = vsel %vm865, 1, 0
        %v930 = vsel %vm866, 1, 0
        %v931 = vsel %vm867, 1, 0
        %v932 = vsel %vm868, 1, 0
        %v933 = vsel %vm869, 1, 0
        %v934 = vsel %vm870, 1, 0
        %v935 = vsel %vm871, 1, 0
        %v936 = vsel %vm872, 1, 0
        %v937 = vsel %vm873, 1, 0
        %v938 = vsel %vm874, 1, 0
        %v939 = vsel %vm875, 1, 0
        %v940 = vsel %vm876, 1, 0
        %v941 = vsel %vm877, 1, 0
        %v942 = vsel %vm878, 1, 0
        %v943 = vsel %vm879, 1, 0
        %v944 = vsel %vm880, 1, 0
        %v945 = vsel %vm881, 1, 0
        %v946 = vsel %vm882, 1, 0
        %v947 = vsel %vm883, 1, 0
        %v948 = vsel %vm884, 1, 0
        %v949 = vsel %vm885, 1, 0
        %v950 = vsel %vm886, 1, 0
        %v951 = vsel %vm887, 1, 0
        %v952 = vsel %vm888, 1, 0
        %v953 = vsel %vm889, 1, 0
        %v954 = vsel %vm890, 1, 0
        %v955 = vsel %vm891, 1, 0
        %v956 = vsel %vm892, 1, 0
        %v957 = vsel %vm893, 1, 0
        %v958 = vsel %vm894, 1, 0
        %v959 = vsel %vm895, 1, 0
        %v960 = vsel %vm896, 1, 0
        %v961 = vsel %vm897, 1, 0
        %v962 = vsel %vm898, 1, 0
        %v963 = vsel %vm899, 1, 0
        %v964 = vcvt.s32.f32 %v900
        %v965 = vcvt.s32.f32 %v901
        %v966 = vcvt.s32.f32 %v902
        %v967 = vcvt.s32.f32 %v903
        %v968 = vcvt.s32.f32 %v904
        %v969 = vcvt.s32.f32 %v905
        %v970 = vcvt.s32.f32 %v906
        %v971 = vcvt.s32.f32 %v907
        %v972 = vcvt.s32.f32 %v908
        %v973 = vcvt.s32.f32 %v909
        %v974 = vcvt.s32.f32 %v910
        %v975 = vcvt.s32.f32 %v911
        %v976 = vcvt.s32.f32 %v912
        %v977 = vcvt.s32.f32 %v913
        %v978 = vcvt.s32.f32 %v914
        %v979 = vcvt.s32.f32 %v915
        %v980 = vcvt.s32.f32 %v916
        %v981 = vcvt.s32.f32 %v917
        %v982 = vcvt.s32.f32 %v918
        %v983 = vcvt.s32.f32 %v919
        %v984 = vcvt.s32.f32 %v920
        %v985 = vcvt.s32.f32 %v921
        %v986 = vcvt.s32.f32 %v922
        %v987 = vcvt.s32.f32 %v923
        %v988 = vcvt.s32.f32 %v924
        %v989 = vcvt.s32.f32 %v925
        %v990 = vcvt.s32.f32 %v926
        %v991 = vcvt.s32.f32 %v927
        %v992 = vcvt.s32.f32 %v928
        %v993 = vcvt.s32.f32 %v929
        %v994 = vcvt.s32.f32 %v930
        %v995 = vcvt.s32.f32 %v931
        %v996 = vcvt.s32.f32 %v932
        %v997 = vcvt.s32.f32 %v933
        %v998 = vcvt.s32.f32 %v934
        %v999 = vcvt.s32.f32 %v935
        %v1000 = vcvt.s32.f32 %v936
        %v1001 = vcvt.s32.f32 %v937
        %v1002 = vcvt.s32.f32 %v938
        %v1003 = vcvt.s32.f32 %v939
        %v1004 = vcvt.s32.f32 %v940
        %v1005 = vcvt.s32.f32 %v941
        %v1006 = vcvt.s32.f32 %v942
        %v1007 = vcvt.s32.f32 %v943
        %v1008 = vcvt.s32.f32 %v944
        %v1009 = vcvt.s32.f32 %v945
        %v1010 = vcvt.s32.f32 %v946
        %v1011 = vcvt.s32.f32 %v947
        %v1012 = vcvt.s32.f32 %v948
        %v1013 = vcvt.s32.f32 %v949
        %v1014 = vcvt.s32.f32 %v950
        %v1015 = vcvt.s32.f32 %v951
        %v1016 = vcvt.s32.f32 %v952
        %v1017 = vcvt.s32.f32 %v953
        %v1018 = vcvt.s32.f32 %v954
        %v1019 = vcvt.s32.f32 %v955
        %v1020 = vcvt.s32.f32 %v956
        %v1021 = vcvt.s32.f32 %v957
        %v1022 = vcvt.s32.f32 %v958
        %v1023 = vcvt.s32.f32 %v959
        %v1024 = vcvt.s32.f32 %v960
        %v1025 = vcvt.s32.f32 %v961
        %v1026 = vcvt.s32.f32 %v962
        %v1027 = vcvt.s32.f32 %v963
        %v1028 = vadd.f32 %v580, %v964
        %v1029 = vadd.f32 %v581, %v965
        %v1030 = vadd.f32 %v582, %v966
        %v1031 = vadd.f32 %v583, %v967
        %v1032 = vadd.f32 %v584, %v968
        %v1033 = vadd.f32 %v585, %v969
        %v1034 = vadd.f32 %v586, %v970
        %v1035 = vadd.f32 %v587, %v971
        %v1036 = vadd.f32 %v588, %v972
        %v1037 = vadd.f32 %v589, %v973
        %v1038 = vadd.f32 %v590, %v974
        %v1039 = vadd.f32 %v591, %v975
        %v1040 = vadd.f32 %v592, %v976
        %v1041 = vadd.f32 %v593, %v977
        %v1042 = vadd.f32 %v594, %v978
        %v1043 = vadd.f32 %v595, %v979
        %v1044 = vadd.f32 %v596, %v980
        %v1045 = vadd.f32 %v597, %v981
        %v1046 = vadd.f32 %v598, %v982
        %v1047 = vadd.f32 %v599, %v983
        %v1048 = vadd.f32 %v600, %v984
        %v1049 = vadd.f32 %v601, %v985
        %v1050 = vadd.f32 %v602, %v986
        %v1051 = vadd.f32 %v603, %v987
        %v1052 = vadd.f32 %v604, %v988
        %v1053 = vadd.f32 %v605, %v989
        %v1054 = vadd.f32 %v606, %v990
        %v1055 = vadd.f32 %v607, %v991
        %v1056 = vadd.f32 %v608, %v992
        %v1057 = vadd.f32 %v609, %v993
        %v1058 = vadd.f32 %v610, %v994
        %v1059 = vadd.f32 %v611, %v995
        %v1060 = vadd.f32 %v612, %v996
        %v1061 = vadd.f32 %v613, %v997
        %v1062 = vadd.f32 %v614, %v998
        %v1063 = vadd.f32 %v615, %v999
        %v1064 = vadd.f32 %v616, %v1000
        %v1065 = vadd.f32 %v617, %v1001
        %v1066 = vadd.f32 %v618, %v1002
        %v1067 = vadd.f32 %v619, %v1003
        %v1068 = vadd.f32 %v620, %v1004
        %v1069 = vadd.f32 %v621, %v1005
        %v1070 = vadd.f32 %v622, %v1006
        %v1071 = vadd.f32 %v623, %v1007
        %v1072 = vadd.f32 %v624, %v1008
        %v1073 = vadd.f32 %v625, %v1009
        %v1074 = vadd.f32 %v626, %v1010
        %v1075 = vadd.f32 %v627, %v1011
        %v1076 = vadd.f32 %v628, %v1012
        %v1077 = vadd.f32 %v629, %v1013
        %v1078 = vadd.f32 %v630, %v1014
        %v1079 = vadd.f32 %v631, %v1015
        %v1080 = vadd.f32 %v632, %v1016
        %v1081 = vadd.f32 %v633, %v1017
        %v1082 = vadd.f32 %v634, %v1018
        %v1083 = vadd.f32 %v635, %v1019
        %v1084 = vadd.f32 %v636, %v1020
        %v1085 = vadd.f32 %v637, %v1021
        %v1086 = vadd.f32 %v638, %v1022
        %v1087 = vadd.f32 %v639, %v1023
        %v1088 = vadd.f32 %v640, %v1024
        %v1089 = vadd.f32 %v641, %v1025
        %v1090 = vadd.f32 %v642, %v1026
        %v1091 = vadd.f32 %v643, %v1027
        %1092 = vset.pattern.permute.xlu0 2
        %1093 = vperm.xlu0 %1092, %v196
        %v1094 = vpop.permute.xlu0 %1093
        %1095 = vset.pattern.permute.xlu0 2
        %1096 = vperm.xlu0 %1095, %v197
        %v1097 = vpop.permute.xlu0 %1096
        %1098 = vset.pattern.permute.xlu0 2
        %1099 = vperm.xlu0 %1098, %v198
        %v1100 = vpop.permute.xlu0 %1099
        %1101 = vset.pattern.permute.xlu0 2
        %1102 = vperm.xlu0 %1101, %v199
        %v1103 = vpop.permute.xlu0 %1102
        %1104 = vset.pattern.permute.xlu0 2
        %1105 = vperm.xlu0 %1104, %v200
        %v1106 = vpop.permute.xlu0 %1105
        %1107 = vset.pattern.permute.xlu0 2
        %1108 = vperm.xlu0 %1107, %v201
        %v1109 = vpop.permute.xlu0 %1108
        %1110 = vset.pattern.permute.xlu0 2
        %1111 = vperm.xlu0 %1110, %v202
        %v1112 = vpop.permute.xlu0 %1111
        %1113 = vset.pattern.permute.xlu0 2
        %1114 = vperm.xlu0 %1113, %v203
        %v1115 = vpop.permute.xlu0 %1114
        %1116 = vset.pattern.permute.xlu0 2
        %1117 = vperm.xlu0 %1116, %v204
        %v1118 = vpop.permute.xlu0 %1117
        %1119 = vset.pattern.permute.xlu0 2
        %1120 = vperm.xlu0 %1119, %v205
        %v1121 = vpop.permute.xlu0 %1120
        %1122 = vset.pattern.permute.xlu0 2
        %1123 = vperm.xlu0 %1122, %v206
        %v1124 = vpop.permute.xlu0 %1123
        %1125 = vset.pattern.permute.xlu0 2
        %1126 = vperm.xlu0 %1125, %v207
        %v1127 = vpop.permute.xlu0 %1126
        %1128 = vset.pattern.permute.xlu0 2
        %1129 = vperm.xlu0 %1128, %v208
        %v1130 = vpop.permute.xlu0 %1129
        %1131 = vset.pattern.permute.xlu0 2
        %1132 = vperm.xlu0 %1131, %v209
        %v1133 = vpop.permute.xlu0 %1132
        %1134 = vset.pattern.permute.xlu0 2
        %1135 = vperm.xlu0 %1134, %v210
        %v1136 = vpop.permute.xlu0 %1135
        %1137 = vset.pattern.permute.xlu0 2
        %1138 = vperm.xlu0 %1137, %v211
        %v1139 = vpop.permute.xlu0 %1138
        %1140 = vset.pattern.permute.xlu0 2
        %1141 = vperm.xlu0 %1140, %v212
        %v1142 = vpop.permute.xlu0 %1141
        %1143 = vset.pattern.permute.xlu0 2
        %1144 = vperm.xlu0 %1143, %v213
        %v1145 = vpop.permute.xlu0 %1144
        %1146 = vset.pattern.permute.xlu0 2
        %1147 = vperm.xlu0 %1146, %v214
        %v1148 = vpop.permute.xlu0 %1147
        %1149 = vset.pattern.permute.xlu0 2
        %1150 = vperm.xlu0 %1149, %v215
        %v1151 = vpop.permute.xlu0 %1150
        %1152 = vset.pattern.permute.xlu0 2
        %1153 = vperm.xlu0 %1152, %v216
        %v1154 = vpop.permute.xlu0 %1153
        %1155 = vset.pattern.permute.xlu0 2
        %1156 = vperm.xlu0 %1155, %v217
        %v1157 = vpop.permute.xlu0 %1156
        %1158 = vset.pattern.permute.xlu0 2
        %1159 = vperm.xlu0 %1158, %v218
        %v1160 = vpop.permute.xlu0 %1159
        %1161 = vset.pattern.permute.xlu0 2
        %1162 = vperm.xlu0 %1161, %v219
        %v1163 = vpop.permute.xlu0 %1162
        %1164 = vset.pattern.permute.xlu0 2
        %1165 = vperm.xlu0 %1164, %v220
        %v1166 = vpop.permute.xlu0 %1165
        %1167 = vset.pattern.permute.xlu0 2
        %1168 = vperm.xlu0 %1167, %v221
        %v1169 = vpop.permute.xlu0 %1168
        %1170 = vset.pattern.permute.xlu0 2
        %1171 = vperm.xlu0 %1170, %v222
        %v1172 = vpop.permute.xlu0 %1171
        %1173 = vset.pattern.permute.xlu0 2
        %1174 = vperm.xlu0 %1173, %v223
        %v1175 = vpop.permute.xlu0 %1174
        %1176 = vset.pattern.permute.xlu0 2
        %1177 = vperm.xlu0 %1176, %v224
        %v1178 = vpop.permute.xlu0 %1177
        %1179 = vset.pattern.permute.xlu0 2
        %1180 = vperm.xlu0 %1179, %v225
        %v1181 = vpop.permute.xlu0 %1180
        %1182 = vset.pattern.permute.xlu0 2
        %1183 = vperm.xlu0 %1182, %v226
        %v1184 = vpop.permute.xlu0 %1183
        %1185 = vset.pattern.permute.xlu0 2
        %1186 = vperm.xlu0 %1185, %v227
        %v1187 = vpop.permute.xlu0 %1186
        %1188 = vset.pattern.permute.xlu0 2
        %1189 = vperm.xlu0 %1188, %v228
        %v1190 = vpop.permute.xlu0 %1189
        %1191 = vset.pattern.permute.xlu0 2
        %1192 = vperm.xlu0 %1191, %v229
        %v1193 = vpop.permute.xlu0 %1192
        %1194 = vset.pattern.permute.xlu0 2
        %1195 = vperm.xlu0 %1194, %v230
        %v1196 = vpop.permute.xlu0 %1195
        %1197 = vset.pattern.permute.xlu0 2
        %1198 = vperm.xlu0 %1197, %v231
        %v1199 = vpop.permute.xlu0 %1198
        %1200 = vset.pattern.permute.xlu0 2
        %1201 = vperm.xlu0 %1200, %v232
        %v1202 = vpop.permute.xlu0 %1201
        %1203 = vset.pattern.permute.xlu0 2
        %1204 = vperm.xlu0 %1203, %v233
        %v1205 = vpop.permute.xlu0 %1204
        %1206 = vset.pattern.permute.xlu0 2
        %1207 = vperm.xlu0 %1206, %v234
        %v1208 = vpop.permute.xlu0 %1207
        %1209 = vset.pattern.permute.xlu0 2
        %1210 = vperm.xlu0 %1209, %v235
        %v1211 = vpop.permute.xlu0 %1210
        %1212 = vset.pattern.permute.xlu0 2
        %1213 = vperm.xlu0 %1212, %v236
        %v1214 = vpop.permute.xlu0 %1213
        %1215 = vset.pattern.permute.xlu0 2
        %1216 = vperm.xlu0 %1215, %v237
        %v1217 = vpop.permute.xlu0 %1216
        %1218 = vset.pattern.permute.xlu0 2
        %1219 = vperm.xlu0 %1218, %v238
        %v1220 = vpop.permute.xlu0 %1219
        %1221 = vset.pattern.permute.xlu0 2
        %1222 = vperm.xlu0 %1221, %v239
        %v1223 = vpop.permute.xlu0 %1222
        %1224 = vset.pattern.permute.xlu0 2
        %1225 = vperm.xlu0 %1224, %v240
        %v1226 = vpop.permute.xlu0 %1225
        %1227 = vset.pattern.permute.xlu0 2
        %1228 = vperm.xlu0 %1227, %v241
        %v1229 = vpop.permute.xlu0 %1228
        %1230 = vset.pattern.permute.xlu0 2
        %1231 = vperm.xlu0 %1230, %v242
        %v1232 = vpop.permute.xlu0 %1231
        %1233 = vset.pattern.permute.xlu0 2
        %1234 = vperm.xlu0 %1233, %v243
        %v1235 = vpop.permute.xlu0 %1234
        %1236 = vset.pattern.permute.xlu0 2
        %1237 = vperm.xlu0 %1236, %v244
        %v1238 = vpop.permute.xlu0 %1237
        %1239 = vset.pattern.permute.xlu0 2
        %1240 = vperm.xlu0 %1239, %v245
        %v1241 = vpop.permute.xlu0 %1240
        %1242 = vset.pattern.permute.xlu0 2
        %1243 = vperm.xlu0 %1242, %v246
        %v1244 = vpop.permute.xlu0 %1243
        %1245 = vset.pattern.permute.xlu0 2
        %1246 = vperm.xlu0 %1245, %v247
        %v1247 = vpop.permute.xlu0 %1246
        %1248 = vset.pattern.permute.xlu0 2
        %1249 = vperm.xlu0 %1248, %v248
        %v1250 = vpop.permute.xlu0 %1249
        %1251 = vset.pattern.permute.xlu0 2
        %1252 = vperm.xlu0 %1251, %v249
        %v1253 = vpop.permute.xlu0 %1252
        %1254 = vset.pattern.permute.xlu0 2
        %1255 = vperm.xlu0 %1254, %v250
        %v1256 = vpop.permute.xlu0 %1255
        %1257 = vset.pattern.permute.xlu0 2
        %1258 = vperm.xlu0 %1257, %v251
        %v1259 = vpop.permute.xlu0 %1258
        %1260 = vset.pattern.permute.xlu0 2
        %1261 = vperm.xlu0 %1260, %v252
        %v1262 = vpop.permute.xlu0 %1261
        %1263 = vset.pattern.permute.xlu0 2
        %1264 = vperm.xlu0 %1263, %v253
        %v1265 = vpop.permute.xlu0 %1264
        %1266 = vset.pattern.permute.xlu0 2
        %1267 = vperm.xlu0 %1266, %v254
        %v1268 = vpop.permute.xlu0 %1267
        %1269 = vset.pattern.permute.xlu0 2
        %1270 = vperm.xlu0 %1269, %v255
        %v1271 = vpop.permute.xlu0 %1270
        %1272 = vset.pattern.permute.xlu0 2
        %1273 = vperm.xlu0 %1272, %v256
        %v1274 = vpop.permute.xlu0 %1273
        %1275 = vset.pattern.permute.xlu0 2
        %1276 = vperm.xlu0 %1275, %v257
        %v1277 = vpop.permute.xlu0 %1276
        %1278 = vset.pattern.permute.xlu0 2
        %1279 = vperm.xlu0 %1278, %v258
        %v1280 = vpop.permute.xlu0 %1279
        %1281 = vset.pattern.permute.xlu0 2
        %1282 = vperm.xlu0 %1281, %v259
        %v1283 = vpop.permute.xlu0 %1282
        %vm1284 = vcmp.eq.s32.totalorder %v1094, %v195
        %vm1285 = vcmp.eq.s32.totalorder %v1097, %v195
        %vm1286 = vcmp.eq.s32.totalorder %v1100, %v195
        %vm1287 = vcmp.eq.s32.totalorder %v1103, %v195
        %vm1288 = vcmp.eq.s32.totalorder %v1106, %v195
        %vm1289 = vcmp.eq.s32.totalorder %v1109, %v195
        %vm1290 = vcmp.eq.s32.totalorder %v1112, %v195
        %vm1291 = vcmp.eq.s32.totalorder %v1115, %v195
        %vm1292 = vcmp.eq.s32.totalorder %v1118, %v195
        %vm1293 = vcmp.eq.s32.totalorder %v1121, %v195
        %vm1294 = vcmp.eq.s32.totalorder %v1124, %v195
        %vm1295 = vcmp.eq.s32.totalorder %v1127, %v195
        %vm1296 = vcmp.eq.s32.totalorder %v1130, %v195
        %vm1297 = vcmp.eq.s32.totalorder %v1133, %v195
        %vm1298 = vcmp.eq.s32.totalorder %v1136, %v195
        %vm1299 = vcmp.eq.s32.totalorder %v1139, %v195
        %vm1300 = vcmp.eq.s32.totalorder %v1142, %v195
        %vm1301 = vcmp.eq.s32.totalorder %v1145, %v195
        %vm1302 = vcmp.eq.s32.totalorder %v1148, %v195
        %vm1303 = vcmp.eq.s32.totalorder %v1151, %v195
        %vm1304 = vcmp.eq.s32.totalorder %v1154, %v195
        %vm1305 = vcmp.eq.s32.totalorder %v1157, %v195
        %vm1306 = vcmp.eq.s32.totalorder %v1160, %v195
        %vm1307 = vcmp.eq.s32.totalorder %v1163, %v195
        %vm1308 = vcmp.eq.s32.totalorder %v1166, %v195
        %vm1309 = vcmp.eq.s32.totalorder %v1169, %v195
        %vm1310 = vcmp.eq.s32.totalorder %v1172, %v195
        %vm1311 = vcmp.eq.s32.totalorder %v1175, %v195
        %vm1312 = vcmp.eq.s32.totalorder %v1178, %v195
        %vm1313 = vcmp.eq.s32.totalorder %v1181, %v195
        %vm1314 = vcmp.eq.s32.totalorder %v1184, %v195
        %vm1315 = vcmp.eq.s32.totalorder %v1187, %v195
        %vm1316 = vcmp.eq.s32.totalorder %v1190, %v195
        %vm1317 = vcmp.eq.s32.totalorder %v1193, %v195
        %vm1318 = vcmp.eq.s32.totalorder %v1196, %v195
        %vm1319 = vcmp.eq.s32.totalorder %v1199, %v195
        %vm1320 = vcmp.eq.s32.totalorder %v1202, %v195
        %vm1321 = vcmp.eq.s32.totalorder %v1205, %v195
        %vm1322 = vcmp.eq.s32.totalorder %v1208, %v195
        %vm1323 = vcmp.eq.s32.totalorder %v1211, %v195
        %vm1324 = vcmp.eq.s32.totalorder %v1214, %v195
        %vm1325 = vcmp.eq.s32.totalorder %v1217, %v195
        %vm1326 = vcmp.eq.s32.totalorder %v1220, %v195
        %vm1327 = vcmp.eq.s32.totalorder %v1223, %v195
        %vm1328 = vcmp.eq.s32.totalorder %v1226, %v195
        %vm1329 = vcmp.eq.s32.totalorder %v1229, %v195
        %vm1330 = vcmp.eq.s32.totalorder %v1232, %v195
        %vm1331 = vcmp.eq.s32.totalorder %v1235, %v195
        %vm1332 = vcmp.eq.s32.totalorder %v1238, %v195
        %vm1333 = vcmp.eq.s32.totalorder %v1241, %v195
        %vm1334 = vcmp.eq.s32.totalorder %v1244, %v195
        %vm1335 = vcmp.eq.s32.totalorder %v1247, %v195
        %vm1336 = vcmp.eq.s32.totalorder %v1250, %v195
        %vm1337 = vcmp.eq.s32.totalorder %v1253, %v195
        %vm1338 = vcmp.eq.s32.totalorder %v1256, %v195
        %vm1339 = vcmp.eq.s32.totalorder %v1259, %v195
        %vm1340 = vcmp.eq.s32.totalorder %v1262, %v195
        %vm1341 = vcmp.eq.s32.totalorder %v1265, %v195
        %vm1342 = vcmp.eq.s32.totalorder %v1268, %v195
        %vm1343 = vcmp.eq.s32.totalorder %v1271, %v195
        %vm1344 = vcmp.eq.s32.totalorder %v1274, %v195
        %vm1345 = vcmp.eq.s32.totalorder %v1277, %v195
        %vm1346 = vcmp.eq.s32.totalorder %v1280, %v195
        %vm1347 = vcmp.eq.s32.totalorder %v1283, %v195
        %v1348 = vsel %vm1284, 1, 0
        %v1349 = vsel %vm1285, 1, 0
        %v1350 = vsel %vm1286, 1, 0
        %v1351 = vsel %vm1287, 1, 0
        %v1352 = vsel %vm1288, 1, 0
        %v1353 = vsel %vm1289, 1, 0
        %v1354 = vsel %vm1290, 1, 0
        %v1355 = vsel %vm1291, 1, 0
        %v1356 = vsel %vm1292, 1, 0
        %v1357 = vsel %vm1293, 1, 0
        %v1358 = vsel %vm1294, 1, 0
        %v1359 = vsel %vm1295, 1, 0
        %v1360 = vsel %vm1296, 1, 0
        %v1361 = vsel %vm1297, 1, 0
        %v1362 = vsel %vm1298, 1, 0
        %v1363 = vsel %vm1299, 1, 0
        %v1364 = vsel %vm1300, 1, 0
        %v1365 = vsel %vm1301, 1, 0
        %v1366 = vsel %vm1302, 1, 0
        %v1367 = vsel %vm1303, 1, 0
        %v1368 = vsel %vm1304, 1, 0
        %v1369 = vsel %vm1305, 1, 0
        %v1370 = vsel %vm1306, 1, 0
        %v1371 = vsel %vm1307, 1, 0
        %v1372 = vsel %vm1308, 1, 0
        %v1373 = vsel %vm1309, 1, 0
        %v1374 = vsel %vm1310, 1, 0
        %v1375 = vsel %vm1311, 1, 0
        %v1376 = vsel %vm1312, 1, 0
        %v1377 = vsel %vm1313, 1, 0
        %v1378 = vsel %vm1314, 1, 0
        %v1379 = vsel %vm1315, 1, 0
        %v1380 = vsel %vm1316, 1, 0
        %v1381 = vsel %vm1317, 1, 0
        %v1382 = vsel %vm1318, 1, 0
        %v1383 = vsel %vm1319, 1, 0
        %v1384 = vsel %vm1320, 1, 0
        %v1385 = vsel %vm1321, 1, 0
        %v1386 = vsel %vm1322, 1, 0
        %v1387 = vsel %vm1323, 1, 0
        %v1388 = vsel %vm1324, 1, 0
        %v1389 = vsel %vm1325, 1, 0
        %v1390 = vsel %vm1326, 1, 0
        %v1391 = vsel %vm1327, 1, 0
        %v1392 = vsel %vm1328, 1, 0
        %v1393 = vsel %vm1329, 1, 0
        %v1394 = vsel %vm1330, 1, 0
        %v1395 = vsel %vm1331, 1, 0
        %v1396 = vsel %vm1332, 1, 0
        %v1397 = vsel %vm1333, 1, 0
        %v1398 = vsel %vm1334, 1, 0
        %v1399 = vsel %vm1335, 1, 0
        %v1400 = vsel %vm1336, 1, 0
        %v1401 = vsel %vm1337, 1, 0
        %v1402 = vsel %vm1338, 1, 0
        %v1403 = vsel %vm1339, 1, 0
        %v1404 = vsel %vm1340, 1, 0
        %v1405 = vsel %vm1341, 1, 0
        %v1406 = vsel %vm1342, 1, 0
        %v1407 = vsel %vm1343, 1, 0
        %v1408 = vsel %vm1344, 1, 0
        %v1409 = vsel %vm1345, 1, 0
        %v1410 = vsel %vm1346, 1, 0
        %v1411 = vsel %vm1347, 1, 0
        %v1412 = vcvt.s32.f32 %v1348
        %v1413 = vcvt.s32.f32 %v1349
        %v1414 = vcvt.s32.f32 %v1350
        %v1415 = vcvt.s32.f32 %v1351
        %v1416 = vcvt.s32.f32 %v1352
        %v1417 = vcvt.s32.f32 %v1353
        %v1418 = vcvt.s32.f32 %v1354
        %v1419 = vcvt.s32.f32 %v1355
        %v1420 = vcvt.s32.f32 %v1356
        %v1421 = vcvt.s32.f32 %v1357
        %v1422 = vcvt.s32.f32 %v1358
        %v1423 = vcvt.s32.f32 %v1359
        %v1424 = vcvt.s32.f32 %v1360
        %v1425 = vcvt.s32.f32 %v1361
        %v1426 = vcvt.s32.f32 %v1362
        %v1427 = vcvt.s32.f32 %v1363
        %v1428 = vcvt.s32.f32 %v1364
        %v1429 = vcvt.s32.f32 %v1365
        %v1430 = vcvt.s32.f32 %v1366
        %v1431 = vcvt.s32.f32 %v1367
        %v1432 = vcvt.s32.f32 %v1368
        %v1433 = vcvt.s32.f32 %v1369
        %v1434 = vcvt.s32.f32 %v1370
        %v1435 = vcvt.s32.f32 %v1371
        %v1436 = vcvt.s32.f32 %v1372
        %v1437 = vcvt.s32.f32 %v1373
        %v1438 = vcvt.s32.f32 %v1374
        %v1439 = vcvt.s32.f32 %v1375
        %v1440 = vcvt.s32.f32 %v1376
        %v1441 = vcvt.s32.f32 %v1377
        %v1442 = vcvt.s32.f32 %v1378
        %v1443 = vcvt.s32.f32 %v1379
        %v1444 = vcvt.s32.f32 %v1380
        %v1445 = vcvt.s32.f32 %v1381
        %v1446 = vcvt.s32.f32 %v1382
        %v1447 = vcvt.s32.f32 %v1383
        %v1448 = vcvt.s32.f32 %v1384
        %v1449 = vcvt.s32.f32 %v1385
        %v1450 = vcvt.s32.f32 %v1386
        %v1451 = vcvt.s32.f32 %v1387
        %v1452 = vcvt.s32.f32 %v1388
        %v1453 = vcvt.s32.f32 %v1389
        %v1454 = vcvt.s32.f32 %v1390
        %v1455 = vcvt.s32.f32 %v1391
        %v1456 = vcvt.s32.f32 %v1392
        %v1457 = vcvt.s32.f32 %v1393
        %v1458 = vcvt.s32.f32 %v1394
        %v1459 = vcvt.s32.f32 %v1395
        %v1460 = vcvt.s32.f32 %v1396
        %v1461 = vcvt.s32.f32 %v1397
        %v1462 = vcvt.s32.f32 %v1398
        %v1463 = vcvt.s32.f32 %v1399
        %v1464 = vcvt.s32.f32 %v1400
        %v1465 = vcvt.s32.f32 %v1401
        %v1466 = vcvt.s32.f32 %v1402
        %v1467 = vcvt.s32.f32 %v1403
        %v1468 = vcvt.s32.f32 %v1404
        %v1469 = vcvt.s32.f32 %v1405
        %v1470 = vcvt.s32.f32 %v1406
        %v1471 = vcvt.s32.f32 %v1407
        %v1472 = vcvt.s32.f32 %v1408
        %v1473 = vcvt.s32.f32 %v1409
        %v1474 = vcvt.s32.f32 %v1410
        %v1475 = vcvt.s32.f32 %v1411
        %v1476 = vadd.f32 %v1028, %v1412
        %v1477 = vadd.f32 %v1029, %v1413
        %v1478 = vadd.f32 %v1030, %v1414
        %v1479 = vadd.f32 %v1031, %v1415
        %v1480 = vadd.f32 %v1032, %v1416
        %v1481 = vadd.f32 %v1033, %v1417
        %v1482 = vadd.f32 %v1034, %v1418
        %v1483 = vadd.f32 %v1035, %v1419
        %v1484 = vadd.f32 %v1036, %v1420
        %v1485 = vadd.f32 %v1037, %v1421
        %v1486 = vadd.f32 %v1038, %v1422
        %v1487 = vadd.f32 %v1039, %v1423
        %v1488 = vadd.f32 %v1040, %v1424
        %v1489 = vadd.f32 %v1041, %v1425
        %v1490 = vadd.f32 %v1042, %v1426
        %v1491 = vadd.f32 %v1043, %v1427
        %v1492 = vadd.f32 %v1044, %v1428
        %v1493 = vadd.f32 %v1045, %v1429
        %v1494 = vadd.f32 %v1046, %v1430
        %v1495 = vadd.f32 %v1047, %v1431
        %v1496 = vadd.f32 %v1048, %v1432
        %v1497 = vadd.f32 %v1049, %v1433
        %v1498 = vadd.f32 %v1050, %v1434
        %v1499 = vadd.f32 %v1051, %v1435
        %v1500 = vadd.f32 %v1052, %v1436
        %v1501 = vadd.f32 %v1053, %v1437
        %v1502 = vadd.f32 %v1054, %v1438
        %v1503 = vadd.f32 %v1055, %v1439
        %v1504 = vadd.f32 %v1056, %v1440
        %v1505 = vadd.f32 %v1057, %v1441
        %v1506 = vadd.f32 %v1058, %v1442
        %v1507 = vadd.f32 %v1059, %v1443
        %v1508 = vadd.f32 %v1060, %v1444
        %v1509 = vadd.f32 %v1061, %v1445
        %v1510 = vadd.f32 %v1062, %v1446
        %v1511 = vadd.f32 %v1063, %v1447
        %v1512 = vadd.f32 %v1064, %v1448
        %v1513 = vadd.f32 %v1065, %v1449
        %v1514 = vadd.f32 %v1066, %v1450
        %v1515 = vadd.f32 %v1067, %v1451
        %v1516 = vadd.f32 %v1068, %v1452
        %v1517 = vadd.f32 %v1069, %v1453
        %v1518 = vadd.f32 %v1070, %v1454
        %v1519 = vadd.f32 %v1071, %v1455
        %v1520 = vadd.f32 %v1072, %v1456
        %v1521 = vadd.f32 %v1073, %v1457
        %v1522 = vadd.f32 %v1074, %v1458
        %v1523 = vadd.f32 %v1075, %v1459
        %v1524 = vadd.f32 %v1076, %v1460
        %v1525 = vadd.f32 %v1077, %v1461
        %v1526 = vadd.f32 %v1078, %v1462
        %v1527 = vadd.f32 %v1079, %v1463
        %v1528 = vadd.f32 %v1080, %v1464
        %v1529 = vadd.f32 %v1081, %v1465
        %v1530 = vadd.f32 %v1082, %v1466
        %v1531 = vadd.f32 %v1083, %v1467
        %v1532 = vadd.f32 %v1084, %v1468
        %v1533 = vadd.f32 %v1085, %v1469
        %v1534 = vadd.f32 %v1086, %v1470
        %v1535 = vadd.f32 %v1087, %v1471
        %v1536 = vadd.f32 %v1088, %v1472
        %v1537 = vadd.f32 %v1089, %v1473
        %v1538 = vadd.f32 %v1090, %v1474
        %v1539 = vadd.f32 %v1091, %v1475
        %v1540 = vld [vmem:[%s1] sm:$0xff]
        %v1541 = vld [vmem:[%s1 + $0x8] sm:$0x1f]
        %v1542 = vld [vmem:[%s191] sm:$0xff]
        %v1543 = vld [vmem:[%s191 + $0x8] sm:$0xff]
        %v1544 = vld [vmem:[%s191 + $0x10] sm:$0xff]
        %v1545 = vld [vmem:[%s191 + $0x18] sm:$0xff]
        %v1546 = vld [vmem:[%s191 + $0x20] sm:$0xff]
        %v1547 = vld [vmem:[%s191 + $0x28] sm:$0xff]
        %v1548 = vld [vmem:[%s191 + $0x30] sm:$0xff]
        %v1549 = vld [vmem:[%s191 + $0x38] sm:$0xff]
        %v1550 = vld [vmem:[%s191 + $0x40] sm:$0xff]
        %v1551 = vld [vmem:[%s191 + $0x48] sm:$0xff]
        %v1552 = vld [vmem:[%s191 + $0x50] sm:$0xff]
        %v1553 = vld [vmem:[%s191 + $0x58] sm:$0xff]
        %v1554 = vld [vmem:[%s191 + $0x60] sm:$0xff]
        %v1555 = vld [vmem:[%s191 + $0x68] sm:$0xff]
        %v1556 = vld [vmem:[%s191 + $0x70] sm:$0xff]
        %v1557 = vld [vmem:[%s191 + $0x78] sm:$0xff]
        %v1558 = vld [vmem:[%s191 + $0x80] sm:$0xff]
        %v1559 = vld [vmem:[%s191 + $0x88] sm:$0xff]
        %v1560 = vld [vmem:[%s191 + $0x90] sm:$0xff]
        %v1561 = vld [vmem:[%s191 + $0x98] sm:$0xff]
        %v1562 = vld [vmem:[%s191 + $0xa0] sm:$0xff]
        %v1563 = vld [vmem:[%s191 + $0xa8] sm:$0xff]
        %v1564 = vld [vmem:[%s191 + $0xb0] sm:$0xff]
        %v1565 = vld [vmem:[%s191 + $0xb8] sm:$0xff]
        %v1566 = vld [vmem:[%s191 + $0xc0] sm:$0xff]
        %v1567 = vld [vmem:[%s191 + $0xc8] sm:$0xff]
        %v1568 = vld [vmem:[%s191 + $0xd0] sm:$0xff]
        %v1569 = vld [vmem:[%s191 + $0xd8] sm:$0xff]
        %v1570 = vld [vmem:[%s191 + $0xe0] sm:$0xff]
        %v1571 = vld [vmem:[%s191 + $0xe8] sm:$0xff]
        %v1572 = vld [vmem:[%s191 + $0xf0] sm:$0xff]
        %v1573 = vld [vmem:[%s191 + $0xf8] sm:$0xff]
        %v1574 = vld [vmem:[%s191 + $0x100] sm:$0xff]
        %v1575 = vld [vmem:[%s191 + $0x108] sm:$0xff]
        %v1576 = vld [vmem:[%s191 + $0x110] sm:$0xff]
        %v1577 = vld [vmem:[%s191 + $0x118] sm:$0xff]
        %v1578 = vld [vmem:[%s191 + $0x120] sm:$0xff]
        %v1579 = vld [vmem:[%s191 + $0x128] sm:$0xff]
        %v1580 = vld [vmem:[%s191 + $0x130] sm:$0xff]
        %v1581 = vld [vmem:[%s191 + $0x138] sm:$0xff]
        %v1582 = vld [vmem:[%s191 + $0x140] sm:$0xff]
        %v1583 = vld [vmem:[%s191 + $0x148] sm:$0xff]
        %v1584 = vld [vmem:[%s191 + $0x150] sm:$0xff]
        %v1585 = vld [vmem:[%s191 + $0x158] sm:$0xff]
        %v1586 = vld [vmem:[%s191 + $0x160] sm:$0xff]
        %v1587 = vld [vmem:[%s191 + $0x168] sm:$0xff]
        %v1588 = vld [vmem:[%s191 + $0x170] sm:$0xff]
        %v1589 = vld [vmem:[%s191 + $0x178] sm:$0xff]
        %v1590 = vld [vmem:[%s191 + $0x180] sm:$0xff]
        %v1591 = vld [vmem:[%s191 + $0x188] sm:$0xff]
        %v1592 = vld [vmem:[%s191 + $0x190] sm:$0xff]
        %v1593 = vld [vmem:[%s191 + $0x198] sm:$0xff]
        %v1594 = vld [vmem:[%s191 + $0x1a0] sm:$0xff]
        %v1595 = vld [vmem:[%s191 + $0x1a8] sm:$0xff]
        %v1596 = vld [vmem:[%s191 + $0x1b0] sm:$0xff]
        %v1597 = vld [vmem:[%s191 + $0x1b8] sm:$0xff]
        %v1598 = vld [vmem:[%s191 + $0x1c0] sm:$0xff]
        %v1599 = vld [vmem:[%s191 + $0x1c8] sm:$0xff]
        %v1600 = vld [vmem:[%s191 + $0x1d0] sm:$0xff]
        %v1601 = vld [vmem:[%s191 + $0x1d8] sm:$0xff]
        %v1602 = vld [vmem:[%s191 + $0x1e0] sm:$0xff]
        %v1603 = vld [vmem:[%s191 + $0x1e8] sm:$0xff]
        %v1604 = vld [vmem:[%s191 + $0x1f0] sm:$0xff]
        %v1605 = vld [vmem:[%s191 + $0x1f8] sm:$0xff]
        %vm1606 = vcmask 105472
        %v1608 = vsel %vm1606, %v1476, 0
        %v1611 = vsel %vm1606, %v1477, 0
        %v1614 = vsel %vm1606, %v1478, 0
        %v1617 = vsel %vm1606, %v1479, 0
        %v1620 = vsel %vm1606, %v1480, 0
        %v1623 = vsel %vm1606, %v1481, 0
        %v1626 = vsel %vm1606, %v1482, 0
        %v1629 = vsel %vm1606, %v1483, 0
        %v1632 = vsel %vm1606, %v1484, 0
        %v1635 = vsel %vm1606, %v1485, 0
        %v1638 = vsel %vm1606, %v1486, 0
        %v1641 = vsel %vm1606, %v1487, 0
        %v1644 = vsel %vm1606, %v1488, 0
        %v1647 = vsel %vm1606, %v1489, 0
        %v1650 = vsel %vm1606, %v1490, 0
        %v1653 = vsel %vm1606, %v1491, 0
        %v1656 = vsel %vm1606, %v1492, 0
        %v1659 = vsel %vm1606, %v1493, 0
        %v1662 = vsel %vm1606, %v1494, 0
        %v1665 = vsel %vm1606, %v1495, 0
        %v1668 = vsel %vm1606, %v1496, 0
        %v1671 = vsel %vm1606, %v1497, 0
        %v1674 = vsel %vm1606, %v1498, 0
        %v1677 = vsel %vm1606, %v1499, 0
        %v1680 = vsel %vm1606, %v1500, 0
        %v1683 = vsel %vm1606, %v1501, 0
        %v1686 = vsel %vm1606, %v1502, 0
        %v1689 = vsel %vm1606, %v1503, 0
        %v1692 = vsel %vm1606, %v1504, 0
        %v1695 = vsel %vm1606, %v1505, 0
        %v1698 = vsel %vm1606, %v1506, 0
        %v1701 = vsel %vm1606, %v1507, 0
        %v1704 = vsel %vm1606, %v1508, 0
        %v1707 = vsel %vm1606, %v1509, 0
        %v1710 = vsel %vm1606, %v1510, 0
        %v1713 = vsel %vm1606, %v1511, 0
        %v1716 = vsel %vm1606, %v1512, 0
        %v1719 = vsel %vm1606, %v1513, 0
        %v1722 = vsel %vm1606, %v1514, 0
        %v1725 = vsel %vm1606, %v1515, 0
        %v1728 = vsel %vm1606, %v1516, 0
        %v1731 = vsel %vm1606, %v1517, 0
        %v1734 = vsel %vm1606, %v1518, 0
        %v1737 = vsel %vm1606, %v1519, 0
        %v1740 = vsel %vm1606, %v1520, 0
        %v1743 = vsel %vm1606, %v1521, 0
        %v1746 = vsel %vm1606, %v1522, 0
        %v1749 = vsel %vm1606, %v1523, 0
        %v1752 = vsel %vm1606, %v1524, 0
        %v1755 = vsel %vm1606, %v1525, 0
        %v1758 = vsel %vm1606, %v1526, 0
        %v1761 = vsel %vm1606, %v1527, 0
        %v1764 = vsel %vm1606, %v1528, 0
        %v1767 = vsel %vm1606, %v1529, 0
        %v1770 = vsel %vm1606, %v1530, 0
        %v1773 = vsel %vm1606, %v1531, 0
        %v1776 = vsel %vm1606, %v1532, 0
        %v1779 = vsel %vm1606, %v1533, 0
        %v1782 = vsel %vm1606, %v1534, 0
        %v1785 = vsel %vm1606, %v1535, 0
        %v1788 = vsel %vm1606, %v1536, 0
        %v1791 = vsel %vm1606, %v1537, 0
        %v1794 = vsel %vm1606, %v1538, 0
        %v1797 = vsel %vm1606, %v1539, 0
        %vm1799 = vcmask 1044480
        %v1801 = vsel %vm1799, %v1541, 0
        %1803 = vmatprep.subr.mxu0 0.0
        %1804 = vmatpush1.msra.mxu0 %v1540
        %1805 = vmatprep.subr.mxu0 0.0
        %1806 = vmatpush1.msra.mxu0 %v1801
        %1807 = vmatprep.subr.mxu0 0.0
        %1808 = vmatpush1.msra.mxu0 0.0
        %1809 = vmatprep.subr.mxu0 0.0
        %1810 = vmatpush1.msra.mxu0 0.0
        %1811 = vmatprep.subr.mxu0 0.0
        %1812 = vmatpush1.msra.mxu0 0.0
        %1813 = vmatprep.subr.mxu0 0.0
        %1814 = vmatpush1.msra.mxu0 0.0
        %1815 = vmatprep.subr.mxu0 0.0
        %1816 = vmatpush1.msra.mxu0 0.0
        %1817 = vmatprep.subr.mxu0 0.0
        %1818 = vmatpush1.msra.mxu0 0.0
        %1819 = vmatprep.subr.mxu0 0.0
        %1820 = vmatpush1.msra.mxu0 0.0
        %1821 = vmatprep.subr.mxu0 0.0
        %1822 = vmatpush1.msra.mxu0 0.0
        %1823 = vmatprep.subr.mxu0 0.0
        %1824 = vmatpush1.msra.mxu0 0.0
        %1825 = vmatprep.subr.mxu0 0.0
        %1826 = vmatpush1.msra.mxu0 0.0
        %1827 = vmatprep.subr.mxu0 0.0
        %1828 = vmatpush1.msra.mxu0 0.0
        %1829 = vmatprep.subr.mxu0 0.0
        %1830 = vmatpush1.msra.mxu0 0.0
        %1831 = vmatprep.subr.mxu0 0.0
        %1832 = vmatpush1.msra.mxu0 0.0
        %1833 = vmatprep.subr.mxu0 0.0
        %1834 = vmatpush1.msra.mxu0 0.0
        %1835 = vmatprep.subr.mxu0 0.0
        %1836 = vmatpush1.msra.mxu0 0.0
        %1837 = vmatprep.subr.mxu0 0.0
        %1838 = vmatpush1.msra.mxu0 0.0
        %1839 = vmatprep.subr.mxu0 0.0
        %1840 = vmatpush1.msra.mxu0 0.0
        %1841 = vmatprep.subr.mxu0 0.0
        %1842 = vmatpush1.msra.mxu0 0.0
        %1843 = vmatprep.subr.mxu0 0.0
        %1844 = vmatpush1.msra.mxu0 0.0
        %1845 = vmatprep.subr.mxu0 0.0
        %1846 = vmatpush1.msra.mxu0 0.0
        %1847 = vmatprep.subr.mxu0 0.0
        %1848 = vmatpush1.msra.mxu0 0.0
        %1849 = vmatprep.subr.mxu0 0.0
        %1850 = vmatpush1.msra.mxu0 0.0
        %1851 = vmatprep.subr.mxu0 0.0
        %1852 = vmatpush1.msra.mxu0 0.0
        %1853 = vmatprep.subr.mxu0 0.0
        %1854 = vmatpush1.msra.mxu0 0.0
        %1855 = vmatprep.subr.mxu0 0.0
        %1856 = vmatpush1.msra.mxu0 0.0
        %1857 = vmatprep.subr.mxu0 0.0
        %1858 = vmatpush1.msra.mxu0 0.0
        %1859 = vmatprep.subr.mxu0 0.0
        %1860 = vmatpush1.msra.mxu0 0.0
        %1861 = vmatprep.subr.mxu0 0.0
        %1862 = vmatpush1.msra.mxu0 0.0
        %1863 = vmatprep.subr.mxu0 0.0
        %1864 = vmatpush1.msra.mxu0 0.0
        %1865 = vmatprep.subr.mxu0 0.0
        %1866 = vmatpush1.msra.mxu0 0.0
        %1867 = vmatprep.mubr.f32.mxu0 0.0
        %1868 = vmatmul.mubr.f32.gmra.mrb[0].mxu0 %v1608
        %v1869 = vpop.f32.mrb[0].mxu0
        %v1870 = vadd.f32 %v1542, %v1869
        %v1871 = vpop.f32.mrb[0].mxu0
        %1872 = vmatprep.mubr.f32.mxu0 0.0
        %1873 = vmatmul.mubr.f32.gmra.mrb[0].mxu0 %v1611
        %v1874 = vpop.f32.mrb[0].mxu0
        %v1875 = vadd.f32 %v1543, %v1874
        %v1876 = vpop.f32.mrb[0].mxu0
        %1877 = vmatprep.mubr.f32.mxu0 0.0
        %1878 = vmatmul.mubr.f32.gmra.mrb[0].mxu0 %v1614
        %v1879 = vpop.f32.mrb[0].mxu0
        %v1880 = vadd.f32 %v1544, %v1879
        %v1881 = vpop.f32.mrb[0].mxu0
        %1882 = vmatprep.mubr.f32.mxu0 0.0
        %1883 = vmatmul.mubr.f32.gmra.mrb[0].mxu0 %v1617
        %v1884 = vpop.f32.mrb[0].mxu0
        %v1885 = vadd.f32 %v1545, %v1884
        %v1886 = vpop.f32.mrb[0].mxu0
        %1887 = vmatprep.mubr.f32.mxu0 0.0
        %1888 = vmatmul.mubr.f32.gmra.mrb[0].mxu0 %v1620
        %v1889 = vpop.f32.mrb[0].mxu0
        %v1890 = vadd.f32 %v1546, %v1889
        %v1891 = vpop.f32.mrb[0].mxu0
        %1892 = vmatprep.mubr.f32.mxu0 0.0
        %1893 = vmatmul.mubr.f32.gmra.mrb[0].mxu0 %v1623
        %v1894 = vpop.f32.mrb[0].mxu0
        %v1895 = vadd.f32 %v1547, %v1894
        %v1896 = vpop.f32.mrb[0].mxu0
        %1897 = vmatprep.mubr.f32.mxu0 0.0
        %1898 = vmatmul.mubr.f32.gmra.mrb[0].mxu0 %v1626
        %v1899 = vpop.f32.mrb[0].mxu0
        %v1900 = vadd.f32 %v1548, %v1899
        %v1901 = vpop.f32.mrb[0].mxu0
        %1902 = vmatprep.mubr.f32.mxu0 0.0
        %1903 = vmatmul.mubr.f32.gmra.mrb[0].mxu0 %v1629
        %v1904 = vpop.f32.mrb[0].mxu0
        %v1905 = vadd.f32 %v1549, %v1904
        %v1906 = vpop.f32.mrb[0].mxu0
        %1907 = vmatprep.mubr.f32.mxu0 0.0
        %1908 = vmatmul.mubr.f32.gmra.mrb[0].mxu0 %v1632
        %v1909 = vpop.f32.mrb[0].mxu0
        %v1910 = vadd.f32 %v1550, %v1909
        %v1911 = vpop.f32.mrb[0].mxu0
        %1912 = vmatprep.mubr.f32.mxu0 0.0
        %1913 = vmatmul.mubr.f32.gmra.mrb[0].mxu0 %v1635
        %v1914 = vpop.f32.mrb[0].mxu0
        %v1915 = vadd.f32 %v1551, %v1914
        %v1916 = vpop.f32.mrb[0].mxu0
        %1917 = vmatprep.mubr.f32.mxu0 0.0
        %1918 = vmatmul.mubr.f32.gmra.mrb[0].mxu0 %v1638
        %v1919 = vpop.f32.mrb[0].mxu0
        %v1920 = vadd.f32 %v1552, %v1919
        %v1921 = vpop.f32.mrb[0].mxu0
        %1922 = vmatprep.mubr.f32.mxu0 0.0
        %1923 = vmatmul.mubr.f32.gmra.mrb[0].mxu0 %v1641
        %v1924 = vpop.f32.mrb[0].mxu0
        %v1925 = vadd.f32 %v1553, %v1924
        %v1926 = vpop.f32.mrb[0].mxu0
        %1927 = vmatprep.mubr.f32.mxu0 0.0
        %1928 = vmatmul.mubr.f32.gmra.mrb[0].mxu0 %v1644
        %v1929 = vpop.f32.mrb[0].mxu0
        %v1930 = vadd.f32 %v1554, %v1929
        %v1931 = vpop.f32.mrb[0].mxu0
        %1932 = vmatprep.mubr.f32.mxu0 0.0
        %1933 = vmatmul.mubr.f32.gmra.mrb[0].mxu0 %v1647
        %v1934 = vpop.f32.mrb[0].mxu0
        %v1935 = vadd.f32 %v1555, %v1934
        %v1936 = vpop.f32.mrb[0].mxu0
        %1937 = vmatprep.mubr.f32.mxu0 0.0
        %1938 = vmatmul.mubr.f32.gmra.mrb[0].mxu0 %v1650
        %v1939 = vpop.f32.mrb[0].mxu0
        %v1940 = vadd.f32 %v1556, %v1939
        %v1941 = vpop.f32.mrb[0].mxu0
        %1942 = vmatprep.mubr.f32.mxu0 0.0
        %1943 = vmatmul.mubr.f32.gmra.mrb[0].mxu0 %v1653
        %v1944 = vpop.f32.mrb[0].mxu0
        %v1945 = vadd.f32 %v1557, %v1944
        %v1946 = vpop.f32.mrb[0].mxu0
        %1947 = vmatprep.mubr.f32.mxu0 0.0
        %1948 = vmatmul.mubr.f32.gmra.mrb[0].mxu0 %v1656
        %v1949 = vpop.f32.mrb[0].mxu0
        %v1950 = vadd.f32 %v1558, %v1949
        %v1951 = vpop.f32.mrb[0].mxu0
        %1952 = vmatprep.mubr.f32.mxu0 0.0
        %1953 = vmatmul.mubr.f32.gmra.mrb[0].mxu0 %v1659
        %v1954 = vpop.f32.mrb[0].mxu0
        %v1955 = vadd.f32 %v1559, %v1954
        %v1956 = vpop.f32.mrb[0].mxu0
        %1957 = vmatprep.mubr.f32.mxu0 0.0
        %1958 = vmatmul.mubr.f32.gmra.mrb[0].mxu0 %v1662
        %v1959 = vpop.f32.mrb[0].mxu0
        %v1960 = vadd.f32 %v1560, %v1959
        %v1961 = vpop.f32.mrb[0].mxu0
        %1962 = vmatprep.mubr.f32.mxu0 0.0
        %1963 = vmatmul.mubr.f32.gmra.mrb[0].mxu0 %v1665
        %v1964 = vpop.f32.mrb[0].mxu0
        %v1965 = vadd.f32 %v1561, %v1964
        %v1966 = vpop.f32.mrb[0].mxu0
        %1967 = vmatprep.mubr.f32.mxu0 0.0
        %1968 = vmatmul.mubr.f32.gmra.mrb[0].mxu0 %v1668
        %v1969 = vpop.f32.mrb[0].mxu0
        %v1970 = vadd.f32 %v1562, %v1969
        %v1971 = vpop.f32.mrb[0].mxu0
        %1972 = vmatprep.mubr.f32.mxu0 0.0
        %1973 = vmatmul.mubr.f32.gmra.mrb[0].mxu0 %v1671
        %v1974 = vpop.f32.mrb[0].mxu0
        %v1975 = vadd.f32 %v1563, %v1974
        %v1976 = vpop.f32.mrb[0].mxu0
        %1977 = vmatprep.mubr.f32.mxu0 0.0
        %1978 = vmatmul.mubr.f32.gmra.mrb[0].mxu0 %v1674
        %v1979 = vpop.f32.mrb[0].mxu0
        %v1980 = vadd.f32 %v1564, %v1979
        %v1981 = vpop.f32.mrb[0].mxu0
        %1982 = vmatprep.mubr.f32.mxu0 0.0
        %1983 = vmatmul.mubr.f32.gmra.mrb[0].mxu0 %v1677
        %v1984 = vpop.f32.mrb[0].mxu0
        %v1985 = vadd.f32 %v1565, %v1984
        %v1986 = vpop.f32.mrb[0].mxu0
        %1987 = vmatprep.mubr.f32.mxu0 0.0
        %1988 = vmatmul.mubr.f32.gmra.mrb[0].mxu0 %v1680
        %v1989 = vpop.f32.mrb[0].mxu0
        %v1990 = vadd.f32 %v1566, %v1989
        %v1991 = vpop.f32.mrb[0].mxu0
        %1992 = vmatprep.mubr.f32.mxu0 0.0
        %1993 = vmatmul.mubr.f32.gmra.mrb[0].mxu0 %v1683
        %v1994 = vpop.f32.mrb[0].mxu0
        %v1995 = vadd.f32 %v1567, %v1994
        %v1996 = vpop.f32.mrb[0].mxu0
        %1997 = vmatprep.mubr.f32.mxu0 0.0
        %1998 = vmatmul.mubr.f32.gmra.mrb[0].mxu0 %v1686
        %v1999 = vpop.f32.mrb[0].mxu0
        %v2000 = vadd.f32 %v1568, %v1999
        %v2001 = vpop.f32.mrb[0].mxu0
        %2002 = vmatprep.mubr.f32.mxu0 0.0
        %2003 = vmatmul.mubr.f32.gmra.mrb[0].mxu0 %v1689
        %v2004 = vpop.f32.mrb[0].mxu0
        %v2005 = vadd.f32 %v1569, %v2004
        %v2006 = vpop.f32.mrb[0].mxu0
        %2007 = vmatprep.mubr.f32.mxu0 0.0
        %2008 = vmatmul.mubr.f32.gmra.mrb[0].mxu0 %v1692
        %v2009 = vpop.f32.mrb[0].mxu0
        %v2010 = vadd.f32 %v1570, %v2009
        %v2011 = vpop.f32.mrb[0].mxu0
        %2012 = vmatprep.mubr.f32.mxu0 0.0
        %2013 = vmatmul.mubr.f32.gmra.mrb[0].mxu0 %v1695
        %v2014 = vpop.f32.mrb[0].mxu0
        %v2015 = vadd.f32 %v1571, %v2014
        %v2016 = vpop.f32.mrb[0].mxu0
        %2017 = vmatprep.mubr.f32.mxu0 0.0
        %2018 = vmatmul.mubr.f32.gmra.mrb[0].mxu0 %v1698
        %v2019 = vpop.f32.mrb[0].mxu0
        %v2020 = vadd.f32 %v1572, %v2019
        %v2021 = vpop.f32.mrb[0].mxu0
        %2022 = vmatprep.mubr.f32.mxu0 0.0
        %2023 = vmatmul.mubr.f32.gmra.mrb[0].mxu0 %v1701
        %v2024 = vpop.f32.mrb[0].mxu0
        %v2025 = vadd.f32 %v1573, %v2024
        %v2026 = vpop.f32.mrb[0].mxu0
        %2027 = vmatprep.mubr.f32.mxu0 0.0
        %2028 = vmatmul.mubr.f32.gmra.mrb[0].mxu0 %v1704
        %v2029 = vpop.f32.mrb[0].mxu0
        %v2030 = vadd.f32 %v1574, %v2029
        %v2031 = vpop.f32.mrb[0].mxu0
        %2032 = vmatprep.mubr.f32.mxu0 0.0
        %2033 = vmatmul.mubr.f32.gmra.mrb[0].mxu0 %v1707
        %v2034 = vpop.f32.mrb[0].mxu0
        %v2035 = vadd.f32 %v1575, %v2034
        %v2036 = vpop.f32.mrb[0].mxu0
        %2037 = vmatprep.mubr.f32.mxu0 0.0
        %2038 = vmatmul.mubr.f32.gmra.mrb[0].mxu0 %v1710
        %v2039 = vpop.f32.mrb[0].mxu0
        %v2040 = vadd.f32 %v1576, %v2039
        %v2041 = vpop.f32.mrb[0].mxu0
        %2042 = vmatprep.mubr.f32.mxu0 0.0
        %2043 = vmatmul.mubr.f32.gmra.mrb[0].mxu0 %v1713
        %v2044 = vpop.f32.mrb[0].mxu0
        %v2045 = vadd.f32 %v1577, %v2044
        %v2046 = vpop.f32.mrb[0].mxu0
        %2047 = vmatprep.mubr.f32.mxu0 0.0
        %2048 = vmatmul.mubr.f32.gmra.mrb[0].mxu0 %v1716
        %v2049 = vpop.f32.mrb[0].mxu0
        %v2050 = vadd.f32 %v1578, %v2049
        %v2051 = vpop.f32.mrb[0].mxu0
        %2052 = vmatprep.mubr.f32.mxu0 0.0
        %2053 = vmatmul.mubr.f32.gmra.mrb[0].mxu0 %v1719
        %v2054 = vpop.f32.mrb[0].mxu0
        %v2055 = vadd.f32 %v1579, %v2054
        %v2056 = vpop.f32.mrb[0].mxu0
        %2057 = vmatprep.mubr.f32.mxu0 0.0
        %2058 = vmatmul.mubr.f32.gmra.mrb[0].mxu0 %v1722
        %v2059 = vpop.f32.mrb[0].mxu0
        %v2060 = vadd.f32 %v1580, %v2059
        %v2061 = vpop.f32.mrb[0].mxu0
        %2062 = vmatprep.mubr.f32.mxu0 0.0
        %2063 = vmatmul.mubr.f32.gmra.mrb[0].mxu0 %v1725
        %v2064 = vpop.f32.mrb[0].mxu0
        %v2065 = vadd.f32 %v1581, %v2064
        %v2066 = vpop.f32.mrb[0].mxu0
        %2067 = vmatprep.mubr.f32.mxu0 0.0
        %2068 = vmatmul.mubr.f32.gmra.mrb[0].mxu0 %v1728
        %v2069 = vpop.f32.mrb[0].mxu0
        %v2070 = vadd.f32 %v1582, %v2069
        %v2071 = vpop.f32.mrb[0].mxu0
        %2072 = vmatprep.mubr.f32.mxu0 0.0
        %2073 = vmatmul.mubr.f32.gmra.mrb[0].mxu0 %v1731
        %v2074 = vpop.f32.mrb[0].mxu0
        %v2075 = vadd.f32 %v1583, %v2074
        %v2076 = vpop.f32.mrb[0].mxu0
        %2077 = vmatprep.mubr.f32.mxu0 0.0
        %2078 = vmatmul.mubr.f32.gmra.mrb[0].mxu0 %v1734
        %v2079 = vpop.f32.mrb[0].mxu0
        %v2080 = vadd.f32 %v1584, %v2079
        %v2081 = vpop.f32.mrb[0].mxu0
        %2082 = vmatprep.mubr.f32.mxu0 0.0
        %2083 = vmatmul.mubr.f32.gmra.mrb[0].mxu0 %v1737
        %v2084 = vpop.f32.mrb[0].mxu0
        %v2085 = vadd.f32 %v1585, %v2084
        %v2086 = vpop.f32.mrb[0].mxu0
        %2087 = vmatprep.mubr.f32.mxu0 0.0
        %2088 = vmatmul.mubr.f32.gmra.mrb[0].mxu0 %v1740
        %v2089 = vpop.f32.mrb[0].mxu0
        %v2090 = vadd.f32 %v1586, %v2089
        %v2091 = vpop.f32.mrb[0].mxu0
        %2092 = vmatprep.mubr.f32.mxu0 0.0
        %2093 = vmatmul.mubr.f32.gmra.mrb[0].mxu0 %v1743
        %v2094 = vpop.f32.mrb[0].mxu0
        %v2095 = vadd.f32 %v1587, %v2094
        %v2096 = vpop.f32.mrb[0].mxu0
        %2097 = vmatprep.mubr.f32.mxu0 0.0
        %2098 = vmatmul.mubr.f32.gmra.mrb[0].mxu0 %v1746
        %v2099 = vpop.f32.mrb[0].mxu0
        %v2100 = vadd.f32 %v1588, %v2099
        %v2101 = vpop.f32.mrb[0].mxu0
        %2102 = vmatprep.mubr.f32.mxu0 0.0
        %2103 = vmatmul.mubr.f32.gmra.mrb[0].mxu0 %v1749
        %v2104 = vpop.f32.mrb[0].mxu0
        %v2105 = vadd.f32 %v1589, %v2104
        %v2106 = vpop.f32.mrb[0].mxu0
        %2107 = vmatprep.mubr.f32.mxu0 0.0
        %2108 = vmatmul.mubr.f32.gmra.mrb[0].mxu0 %v1752
        %v2109 = vpop.f32.mrb[0].mxu0
        %v2110 = vadd.f32 %v1590, %v2109
        %v2111 = vpop.f32.mrb[0].mxu0
        %2112 = vmatprep.mubr.f32.mxu0 0.0
        %2113 = vmatmul.mubr.f32.gmra.mrb[0].mxu0 %v1755
        %v2114 = vpop.f32.mrb[0].mxu0
        %v2115 = vadd.f32 %v1591, %v2114
        %v2116 = vpop.f32.mrb[0].mxu0
        %2117 = vmatprep.mubr.f32.mxu0 0.0
        %2118 = vmatmul.mubr.f32.gmra.mrb[0].mxu0 %v1758
        %v2119 = vpop.f32.mrb[0].mxu0
        %v2120 = vadd.f32 %v1592, %v2119
        %v2121 = vpop.f32.mrb[0].mxu0
        %2122 = vmatprep.mubr.f32.mxu0 0.0
        %2123 = vmatmul.mubr.f32.gmra.mrb[0].mxu0 %v1761
        %v2124 = vpop.f32.mrb[0].mxu0
        %v2125 = vadd.f32 %v1593, %v2124
        %v2126 = vpop.f32.mrb[0].mxu0
        %2127 = vmatprep.mubr.f32.mxu0 0.0
        %2128 = vmatmul.mubr.f32.gmra.mrb[0].mxu0 %v1764
        %v2129 = vpop.f32.mrb[0].mxu0
        %v2130 = vadd.f32 %v1594, %v2129
        %v2131 = vpop.f32.mrb[0].mxu0
        %2132 = vmatprep.mubr.f32.mxu0 0.0
        %2133 = vmatmul.mubr.f32.gmra.mrb[0].mxu0 %v1767
        %v2134 = vpop.f32.mrb[0].mxu0
        %v2135 = vadd.f32 %v1595, %v2134
        %v2136 = vpop.f32.mrb[0].mxu0
        %2137 = vmatprep.mubr.f32.mxu0 0.0
        %2138 = vmatmul.mubr.f32.gmra.mrb[0].mxu0 %v1770
        %v2139 = vpop.f32.mrb[0].mxu0
        %v2140 = vadd.f32 %v1596, %v2139
        %v2141 = vpop.f32.mrb[0].mxu0
        %2142 = vmatprep.mubr.f32.mxu0 0.0
        %2143 = vmatmul.mubr.f32.gmra.mrb[0].mxu0 %v1773
        %v2144 = vpop.f32.mrb[0].mxu0
        %v2145 = vadd.f32 %v1597, %v2144
        %v2146 = vpop.f32.mrb[0].mxu0
        %2147 = vmatprep.mubr.f32.mxu0 0.0
        %2148 = vmatmul.mubr.f32.gmra.mrb[0].mxu0 %v1776
        %v2149 = vpop.f32.mrb[0].mxu0
        %v2150 = vadd.f32 %v1598, %v2149
        %v2151 = vpop.f32.mrb[0].mxu0
        %2152 = vmatprep.mubr.f32.mxu0 0.0
        %2153 = vmatmul.mubr.f32.gmra.mrb[0].mxu0 %v1779
        %v2154 = vpop.f32.mrb[0].mxu0
        %v2155 = vadd.f32 %v1599, %v2154
        %v2156 = vpop.f32.mrb[0].mxu0
        %2157 = vmatprep.mubr.f32.mxu0 0.0
        %2158 = vmatmul.mubr.f32.gmra.mrb[0].mxu0 %v1782
        %v2159 = vpop.f32.mrb[0].mxu0
        %v2160 = vadd.f32 %v1600, %v2159
        %v2161 = vpop.f32.mrb[0].mxu0
        %2162 = vmatprep.mubr.f32.mxu0 0.0
        %2163 = vmatmul.mubr.f32.gmra.mrb[0].mxu0 %v1785
        %v2164 = vpop.f32.mrb[0].mxu0
        %v2165 = vadd.f32 %v1601, %v2164
        %v2166 = vpop.f32.mrb[0].mxu0
        %2167 = vmatprep.mubr.f32.mxu0 0.0
        %2168 = vmatmul.mubr.f32.gmra.mrb[0].mxu0 %v1788
        %v2169 = vpop.f32.mrb[0].mxu0
        %v2170 = vadd.f32 %v1602, %v2169
        %v2171 = vpop.f32.mrb[0].mxu0
        %2172 = vmatprep.mubr.f32.mxu0 0.0
        %2173 = vmatmul.mubr.f32.gmra.mrb[0].mxu0 %v1791
        %v2174 = vpop.f32.mrb[0].mxu0
        %v2175 = vadd.f32 %v1603, %v2174
        %v2176 = vpop.f32.mrb[0].mxu0
        %2177 = vmatprep.mubr.f32.mxu0 0.0
        %2178 = vmatmul.mubr.f32.gmra.mrb[0].mxu0 %v1794
        %v2179 = vpop.f32.mrb[0].mxu0
        %v2180 = vadd.f32 %v1604, %v2179
        %v2181 = vpop.f32.mrb[0].mxu0
        %2182 = vmatprep.mubr.f32.mxu0 0.0
        %2183 = vmatmul.mubr.f32.gmra.mrb[0].mxu0 %v1797
        %v2184 = vpop.f32.mrb[0].mxu0
        %v2185 = vadd.f32 %v1605, %v2184
        %v2186 = vpop.f32.mrb[0].mxu0
        %2187 = vdwg.mxu0
        %v2188 = vmax.f32 %v1870, 0.0
        %v2189 = vmax.f32 %v1875, 0.0
        %v2190 = vmax.f32 %v1880, 0.0
        %v2191 = vmax.f32 %v1885, 0.0
        %v2192 = vmax.f32 %v1890, 0.0
        %v2193 = vmax.f32 %v1895, 0.0
        %v2194 = vmax.f32 %v1900, 0.0
        %v2195 = vmax.f32 %v1905, 0.0
        %v2196 = vmax.f32 %v1910, 0.0
        %v2197 = vmax.f32 %v1915, 0.0
        %v2198 = vmax.f32 %v1920, 0.0
        %v2199 = vmax.f32 %v1925, 0.0
        %v2200 = vmax.f32 %v1930, 0.0
        %v2201 = vmax.f32 %v1935, 0.0
        %v2202 = vmax.f32 %v1940, 0.0
        %v2203 = vmax.f32 %v1945, 0.0
        %v2204 = vmax.f32 %v1950, 0.0
        %v2205 = vmax.f32 %v1955, 0.0
        %v2206 = vmax.f32 %v1960, 0.0
        %v2207 = vmax.f32 %v1965, 0.0
        %v2208 = vmax.f32 %v1970, 0.0
        %v2209 = vmax.f32 %v1975, 0.0
        %v2210 = vmax.f32 %v1980, 0.0
        %v2211 = vmax.f32 %v1985, 0.0
        %v2212 = vmax.f32 %v1990, 0.0
        %v2213 = vmax.f32 %v1995, 0.0
        %v2214 = vmax.f32 %v2000, 0.0
        %v2215 = vmax.f32 %v2005, 0.0
        %v2216 = vmax.f32 %v2010, 0.0
        %v2217 = vmax.f32 %v2015, 0.0
        %v2218 = vmax.f32 %v2020, 0.0
        %v2219 = vmax.f32 %v2025, 0.0
        %v2220 = vmax.f32 %v2030, 0.0
        %v2221 = vmax.f32 %v2035, 0.0
        %v2222 = vmax.f32 %v2040, 0.0
        %v2223 = vmax.f32 %v2045, 0.0
        %v2224 = vmax.f32 %v2050, 0.0
        %v2225 = vmax.f32 %v2055, 0.0
        %v2226 = vmax.f32 %v2060, 0.0
        %v2227 = vmax.f32 %v2065, 0.0
        %v2228 = vmax.f32 %v2070, 0.0
        %v2229 = vmax.f32 %v2075, 0.0
        %v2230 = vmax.f32 %v2080, 0.0
        %v2231 = vmax.f32 %v2085, 0.0
        %v2232 = vmax.f32 %v2090, 0.0
        %v2233 = vmax.f32 %v2095, 0.0
        %v2234 = vmax.f32 %v2100, 0.0
        %v2235 = vmax.f32 %v2105, 0.0
        %v2236 = vmax.f32 %v2110, 0.0
        %v2237 = vmax.f32 %v2115, 0.0
        %v2238 = vmax.f32 %v2120, 0.0
        %v2239 = vmax.f32 %v2125, 0.0
        %v2240 = vmax.f32 %v2130, 0.0
        %v2241 = vmax.f32 %v2135, 0.0
        %v2242 = vmax.f32 %v2140, 0.0
        %v2243 = vmax.f32 %v2145, 0.0
        %v2244 = vmax.f32 %v2150, 0.0
        %v2245 = vmax.f32 %v2155, 0.0
        %v2246 = vmax.f32 %v2160, 0.0
        %v2247 = vmax.f32 %v2165, 0.0
        %v2248 = vmax.f32 %v2170, 0.0
        %v2249 = vmax.f32 %v2175, 0.0
        %v2250 = vmax.f32 %v2180, 0.0
        %v2251 = vmax.f32 %v2185, 0.0
        %2252 = vst [vmem:[%s180] sm:$0xff] %v2188
        %2253 = vst [vmem:[%s180 + $0x8] sm:$0xff] %v2189
        %2254 = vst [vmem:[%s180 + $0x10] sm:$0xff] %v2190
        %2255 = vst [vmem:[%s180 + $0x18] sm:$0xff] %v2191
        %2256 = vst [vmem:[%s180 + $0x20] sm:$0xff] %v2192
        %2257 = vst [vmem:[%s180 + $0x28] sm:$0xff] %v2193
        %2258 = vst [vmem:[%s180 + $0x30] sm:$0xff] %v2194
        %2259 = vst [vmem:[%s180 + $0x38] sm:$0xff] %v2195
        %2260 = vst [vmem:[%s180 + $0x40] sm:$0xff] %v2196
        %2261 = vst [vmem:[%s180 + $0x48] sm:$0xff] %v2197
        %2262 = vst [vmem:[%s180 + $0x50] sm:$0xff] %v2198
        %2263 = vst [vmem:[%s180 + $0x58] sm:$0xff] %v2199
        %2264 = vst [vmem:[%s180 + $0x60] sm:$0xff] %v2200
        %2265 = vst [vmem:[%s180 + $0x68] sm:$0xff] %v2201
        %2266 = vst [vmem:[%s180 + $0x70] sm:$0xff] %v2202
        %2267 = vst [vmem:[%s180 + $0x78] sm:$0xff] %v2203
        %2268 = vst [vmem:[%s180 + $0x80] sm:$0xff] %v2204
        %2269 = vst [vmem:[%s180 + $0x88] sm:$0xff] %v2205
        %2270 = vst [vmem:[%s180 + $0x90] sm:$0xff] %v2206
        %2271 = vst [vmem:[%s180 + $0x98] sm:$0xff] %v2207
        %2272 = vst [vmem:[%s180 + $0xa0] sm:$0xff] %v2208
        %2273 = vst [vmem:[%s180 + $0xa8] sm:$0xff] %v2209
        %2274 = vst [vmem:[%s180 + $0xb0] sm:$0xff] %v2210
        %2275 = vst [vmem:[%s180 + $0xb8] sm:$0xff] %v2211
        %2276 = vst [vmem:[%s180 + $0xc0] sm:$0xff] %v2212
        %2277 = vst [vmem:[%s180 + $0xc8] sm:$0xff] %v2213
        %2278 = vst [vmem:[%s180 + $0xd0] sm:$0xff] %v2214
        %2279 = vst [vmem:[%s180 + $0xd8] sm:$0xff] %v2215
        %2280 = vst [vmem:[%s180 + $0xe0] sm:$0xff] %v2216
        %2281 = vst [vmem:[%s180 + $0xe8] sm:$0xff] %v2217
        %2282 = vst [vmem:[%s180 + $0xf0] sm:$0xff] %v2218
        %2283 = vst [vmem:[%s180 + $0xf8] sm:$0xff] %v2219
        %2284 = vst [vmem:[%s180 + $0x100] sm:$0xff] %v2220
        %2285 = vst [vmem:[%s180 + $0x108] sm:$0xff] %v2221
        %2286 = vst [vmem:[%s180 + $0x110] sm:$0xff] %v2222
        %2287 = vst [vmem:[%s180 + $0x118] sm:$0xff] %v2223
        %2288 = vst [vmem:[%s180 + $0x120] sm:$0xff] %v2224
        %2289 = vst [vmem:[%s180 + $0x128] sm:$0xff] %v2225
        %2290 = vst [vmem:[%s180 + $0x130] sm:$0xff] %v2226
        %2291 = vst [vmem:[%s180 + $0x138] sm:$0xff] %v2227
        %2292 = vst [vmem:[%s180 + $0x140] sm:$0xff] %v2228
        %2293 = vst [vmem:[%s180 + $0x148] sm:$0xff] %v2229
        %2294 = vst [vmem:[%s180 + $0x150] sm:$0xff] %v2230
        %2295 = vst [vmem:[%s180 + $0x158] sm:$0xff] %v2231
        %2296 = vst [vmem:[%s180 + $0x160] sm:$0xff] %v2232
        %2297 = vst [vmem:[%s180 + $0x168] sm:$0xff] %v2233
        %2298 = vst [vmem:[%s180 + $0x170] sm:$0xff] %v2234
        %2299 = vst [vmem:[%s180 + $0x178] sm:$0xff] %v2235
        %2300 = vst [vmem:[%s180 + $0x180] sm:$0xff] %v2236
        %2301 = vst [vmem:[%s180 + $0x188] sm:$0xff] %v2237
        %2302 = vst [vmem:[%s180 + $0x190] sm:$0xff] %v2238
        %2303 = vst [vmem:[%s180 + $0x198] sm:$0xff] %v2239
        %2304 = vst [vmem:[%s180 + $0x1a0] sm:$0xff] %v2240
        %2305 = vst [vmem:[%s180 + $0x1a8] sm:$0xff] %v2241
        %2306 = vst [vmem:[%s180 + $0x1b0] sm:$0xff] %v2242
        %2307 = vst [vmem:[%s180 + $0x1b8] sm:$0xff] %v2243
        %2308 = vst [vmem:[%s180 + $0x1c0] sm:$0xff] %v2244
        %2309 = vst [vmem:[%s180 + $0x1c8] sm:$0xff] %v2245
        %2310 = vst [vmem:[%s180 + $0x1d0] sm:$0xff] %v2246
        %2311 = vst [vmem:[%s180 + $0x1d8] sm:$0xff] %v2247
        %2312 = vst [vmem:[%s180 + $0x1e0] sm:$0xff] %v2248
        %2313 = vst [vmem:[%s180 + $0x1e8] sm:$0xff] %v2249
        %2314 = vst [vmem:[%s180 + $0x1f0] sm:$0xff] %v2250
        %2315 = vst [vmem:[%s180 + $0x1f8] sm:$0xff] %v2251
        %s2316 = sand.u32 %s98, 1
        %s2317 = scalar_lea.sflag [#allocation3], %s2316
        %s2318 = sand.u32 %s98, 1
        %s2319 = smul.addr %s2318, 512
        %s2320 = scalar_lea.vmem [#allocation2], %s2319
        // Predicated region
        $region33: #{tpu_custom_call.1} parent=31 // pred_check
          %p2321 = pneg %p108
        $region34: #{tpu_custom_call.1} parent=31 // pred_check_branch
          %2323 = sbr.rel (%p2321) target = $region36
        $region35: #{tpu_custom_call.1} parent=31 // pred_region
          %s2324 = smul.u32 64, %s17
          %s2326 = ssub.s32 8192, 8192
          %2327 = vsyncadd %s2317, %s2326
          %s2328 = smul.addr %s2324, 128
          %s2329 = scalar_lea.hbm %s3, %s2328
          %s2330 = sshll.u32 %s2320, 4
          %s2331 = int_to_ptr.vmem [resolvable:$true] %s2330
          %2336 = dma.vmem_to_hbm [thread:$0]  %s2331, 8192, %s2329, %s2317, 128, 128, 8
        $region36: #{tpu_custom_call.1} parent=31 // pred_fallthru
          _
      $region32: #{tpu_custom_call.1} parent=5 // pred_fallthru
        _
      %p2337 = scmp.le.s32.totalorder 2, %s12
      // Predicated region
      $region37: #{tpu_custom_call.1} parent=5 // pred_check
        %p2338 = pneg %p2337
      $region38: #{tpu_custom_call.1} parent=5 // pred_check_branch
        %2340 = sbr.rel (%p2338) target = $region40
      $region39: #{tpu_custom_call.1} parent=5 // pred_region
        %s2341 = ssub.s32 %s12, 2
        // Predicated region
        $region41: #{tpu_custom_call.1} parent=39 // pred_check
          %p2342 = pneg %p114
        $region42: #{tpu_custom_call.1} parent=39 // pred_check_branch
          %2344 = sbr.rel (%p2342) target = $region44
        $region43: #{tpu_custom_call.1} parent=39 // pred_region
          %s2345 = sand.u32 %s99, 1
          %s2346 = scalar_lea.sflag [#allocation3], %s2345
          %s2347 = sand.u32 %s99, 1
          %s2348 = smul.addr %s2347, 512
          %s2349 = scalar_lea.vmem [#allocation2], %s2348
          %2350 = dma.done %s2346, 8192
        $region44: #{tpu_custom_call.1} parent=39 // pred_fallthru
          _
      $region40: #{tpu_custom_call.1} parent=5 // pred_fallthru
        _
    $region6: #{tpu_custom_call.1} parent=1 // loop_footer
      %s16 = sadd.s32 1, %s12
    $region7: #{tpu_custom_call.1} parent=1 // loop_footer_branch
      %11 = sbr.rel target = $region3
    $region8: #{tpu_custom_call.1} parent=1 // loop_exit
      _
    %2351 = vsyncpa [#allocation3], 1
    %s2352 = scalar_lea.sflag [#allocation3], 1
    %2353 = vsyncpa %s2352, 1

</llo_original>
